<compile_context>
chip_gen: v5e
topology: v5e:2x2
jax: 0.10.0
libtpu: 0.0.40
codegen_flags: <defaults>
</compile_context>

<pallas_src>
from functools import partial

import jax
import jax.numpy as jnp
from jax.experimental import pallas as pl
from jax.experimental.pallas import tpu as pltpu


def _round_up(x, mult):
    return ((x + mult - 1) // mult) * mult


def _pick_tile(total, candidates=(512, 256, 128)):
    for c in candidates:
        if total >= c and total % c == 0:
            return c
    return total


# ---------------------------------------------------------------------------
# Single fused kernel, grid = (queue-column tiles, in_features reduction tiles):
#   j == 0 path (per reduction tile k):
#     wk_new_tile = wk_tile*(1-m) + wq_tile*m          (momentum blend, fused)
#     acc_q += xq_tile @ wq_tile ; acc_k += xk_tile @ wk_new_tile
#   j == 0, k == last:  add biases, emit out_q / out_k slabs, l_pos (lane-dense)
#   every j, k == last:  l_neg tile = out_q_slab @ queue_tile  (queue rows >= dim
#                        are zero, so the full-slab contraction equals feat_q @ Q)
# Fused weight column layout: [0:dim]=feat head, [dim:dim+ncls]=pred head, rest 0.
# ---------------------------------------------------------------------------
def _moco_fused_kernel(xq_ref, xk_ref, wq_ref, bq_ref, wk_ref, bk_ref, queue_ref,
                       outq_ref, outk_ref, lpos_ref, lneg_ref,
                       wk_new_ref, bk_new_ref, acc_q, acc_k,
                       *, m, inv_t, dim, n_kin):
    j = pl.program_id(0)   # queue-column tile (outer, "arbitrary")
    k = pl.program_id(1)   # in_features reduction tile (inner, "arbitrary")
    one_m = 1.0 - m

    # ---- init accumulators; blend the (tiny) key bias once -----------------
    @pl.when(jnp.logical_and(j == 0, k == 0))
    def _():
        acc_q[...] = jnp.zeros_like(acc_q)
        acc_k[...] = jnp.zeros_like(acc_k)
        bk_new_ref[...] = bk_ref[...] * one_m + bq_ref[...] * m

    # ---- encoder reduction; momentum blend fused per weight tile -----------
    @pl.when(j == 0)
    def _():
        wk_new_tile = wk_ref[...] * one_m + wq_ref[...] * m      # f32 master blend
        wk_new_ref[...] = wk_new_tile                            # aliased writeback
        acc_q[...] += jnp.dot(xq_ref[...], wq_ref[...].astype(jnp.bfloat16),
                              preferred_element_type=jnp.float32)
        acc_k[...] += jnp.dot(xk_ref[...], wk_new_tile.astype(jnp.bfloat16),
                              preferred_element_type=jnp.float32)

    # ---- finalize encoders (+bias), emit slabs + lane-dense l_pos ----------
    @pl.when(jnp.logical_and(j == 0, k == n_kin - 1))
    def _():
        out_q = acc_q[...] + bq_ref[...]
        out_k = acc_k[...] + (bk_ref[...] * one_m + bq_ref[...] * m)
        acc_q[...] = out_q          # keep biased slabs resident for all queue tiles
        acc_k[...] = out_k
        outq_ref[...] = out_q
        outk_ref[...] = out_k
        # l_pos over the feat head only, via a lane mask (no sub-128 slice),
        # written as a lane-dense 128-wide block (wrapper takes column 0).
        lane = jax.lax.broadcasted_iota(jnp.int32, out_q.shape, 1)
        feat_mask = (lane < dim).astype(jnp.float32)
        l_pos = jnp.sum(out_q * out_k * feat_mask, axis=-1, keepdims=True)  # f32
        lpos_ref[...] = jnp.broadcast_to(l_pos * inv_t, lpos_ref.shape)

    # ---- l_neg tile for this queue block (queue rows >= dim are zero) ------
    @pl.when(k == n_kin - 1)
    def _():
        lneg_ref[...] = jnp.dot(acc_q[...].astype(jnp.bfloat16), queue_ref[...],
                                preferred_element_type=jnp.float32) * inv_t


def moco_fused_forward(xq, xk, wq, bq, wk, bk, queue, *, m, temperature, dim,
                       tk_in, tn_q):
    n, in_features = xq.shape
    out_pad = wq.shape[1]
    kq = queue.shape[1]
    assert in_features % tk_in == 0 and kq % tn_q == 0
    n_kin = in_features // tk_in
    n_kq = kq // tn_q

    # Pin x / W block indices to the last reduction tile once j > 0 so encoder
    # operands are not re-streamed from HBM for every queue-column tile.
    def x_map(j, k):
        return (0, jnp.where(j == 0, k, n_kin - 1))

    def w_map(j, k):
        return (jnp.where(j == 0, k, n_kin - 1), 0)

    full_row = lambda j, k: (0, 0)

    in_specs = [
        pl.BlockSpec((n, tk_in), x_map),                       # x_q (bf16)
        pl.BlockSpec((n, tk_in), x_map),                       # x_k (bf16)
        pl.BlockSpec((tk_in, out_pad), w_map),                 # W_q fused (f32)
        pl.BlockSpec((1, out_pad), full_row),                  # b_q fused (f32)
        pl.BlockSpec((tk_in, out_pad), w_map),                 # W_k fused (f32)
        pl.BlockSpec((1, out_pad), full_row),                  # b_k fused (f32)
        pl.BlockSpec((out_pad, tn_q), lambda j, k: (0, j)),    # queue (bf16)
    ]
    out_specs = (
        pl.BlockSpec((n, out_pad), full_row),                  # out_q slab
        pl.BlockSpec((n, out_pad), full_row),                  # out_k slab
        pl.BlockSpec((n, 128), full_row),                      # l_pos (lane-dense)
        pl.BlockSpec((n, tn_q), lambda j, k: (0, j)),          # l_neg tiles
        pl.BlockSpec((tk_in, out_pad), w_map),                 # blended W_k (aliased)
        pl.BlockSpec((1, out_pad), full_row),                  # blended b_k (aliased)
    )
    out_shape = (
        jax.ShapeDtypeStruct((n, out_pad), jnp.float32),
        jax.ShapeDtypeStruct((n, out_pad), jnp.float32),
        jax.ShapeDtypeStruct((n, 128), jnp.float32),
        jax.ShapeDtypeStruct((n, kq), jnp.float32),
        jax.ShapeDtypeStruct(wk.shape, jnp.float32),
        jax.ShapeDtypeStruct(bk.shape, jnp.float32),
    )

    # VMEM budget derived from the actual (double-buffered) per-dtype tile traffic;
    # capped at 64 MiB so the same budget also fits v7x.
    vmem_tiles = (2 * 2 * (n * tk_in * 2)                       # x_q, x_k (bf16)
                  + 2 * 2 * (tk_in * out_pad * 4)               # W_q, W_k (f32)
                  + 2 * 2 * (out_pad * 4)                       # b_q, b_k
                  + 2 * (out_pad * tn_q * 2)                    # queue (bf16)
                  + 2 * 2 * (n * out_pad * 4)                   # out_q, out_k
                  + 2 * (n * 128 * 4) + 2 * (n * tn_q * 4)      # l_pos, l_neg
                  + 2 * (tk_in * out_pad * 4) + 2 * (out_pad * 4)   # W_k_new, b_k_new
                  + 2 * (n * out_pad * 4))                      # accumulators
    vmem_limit = int(min(max(4 * vmem_tiles, 32 * 1024 * 1024), 64 * 1024 * 1024))

    flops = (2 * 2 * n * in_features * out_pad          # two encoder matmuls
             + 2 * n * out_pad * kq                     # l_neg
             + 3 * n * out_pad                          # l_pos
             + 3 * (wq.size + bq.size))                 # momentum blend
    bytes_accessed = (2 * (xq.size + xk.size)                     # bf16 activations
                      + 4 * (3 * wq.size + 3 * bq.size)           # f32 W/b reads + blended writes
                      + 2 * queue.size                            # bf16 queue
                      + 4 * (2 * n * out_pad + n * 128 + n * kq)) # f32 outputs

    kernel = partial(_moco_fused_kernel, m=float(m), inv_t=float(1.0 / temperature),
                     dim=int(dim), n_kin=int(n_kin))

    return pl.pallas_call(
        kernel,
        out_shape=out_shape,
        grid_spec=pltpu.PrefetchScalarGridSpec(
            num_scalar_prefetch=0,
            grid=(n_kq, n_kin),
            in_specs=in_specs,
            out_specs=out_specs,
            scratch_shapes=[pltpu.VMEM((n, out_pad), jnp.float32),
                            pltpu.VMEM((n, out_pad), jnp.float32)]),
        # in-place momentum update: wk -> wk_new, bk -> bk_new
        input_output_aliases={4: 4, 5: 5},
        compiler_params=pltpu.CompilerParams(
            dimension_semantics=("arbitrary", "arbitrary"),
            vmem_limit_bytes=vmem_limit),
        cost_estimate=pl.CostEstimate(flops=int(flops), transcendentals=0,
                                      bytes_accessed=int(bytes_accessed)),
    )(xq, xk, wq, bq, wk, bk, queue)


# ---------------------------------------------------------------------------
# MoCo module (training-mode forward).  The external encoders are modeled as
# deterministic linear encoders producing (pred, feat) from flattened images.
# ---------------------------------------------------------------------------
class MoCo:
    def __init__(self, key, in_features, num_classes, dim=32, m=0.8, K=128, T=0.07):
        self.dim, self.K, self.T, self.m = dim, K, T, m
        self.num_classes = num_classes
        self.out_pad = _round_up(dim + num_classes, 128)
        self.tk_in = _pick_tile(in_features)
        self.tn_q = _pick_tile(K)

        k1, k2, k3, k4, k5 = jax.random.split(key, 5)
        w_feat = jax.random.normal(k1, (in_features, dim), jnp.float32) * 0.02
        b_feat = jax.random.normal(k2, (dim,), jnp.float32) * 0.02
        w_pred = jax.random.normal(k3, (in_features, num_classes), jnp.float32) * 0.02
        b_pred = jax.random.normal(k4, (num_classes,), jnp.float32) * 0.02

        # Fused lane-padded (feat | pred | 0) heads; the key copy owns a DISTINCT
        # buffer because it is donated via input_output_aliases.
        self.wq_fused, self.bq_fused = self._fuse(w_feat, b_feat, w_pred, b_pred)
        self.wk_fused, self.bk_fused = self._fuse(w_feat, b_feat, w_pred, b_pred)

        # register_buffer('queue', torch.randn(dim, K)) -> HBM-resident bf16,
        # row-padded to out_pad (rows >= dim are zero) for lane-aligned l_neg.
        q0 = jax.random.normal(k5, (dim, K), jnp.float32).astype(jnp.bfloat16)
        self.queue = jnp.zeros((self.out_pad, K), jnp.bfloat16).at[:dim, :].set(q0)
        self.queue_ptr = 0

    def _fuse(self, w_feat, b_feat, w_pred, b_pred):
        in_features, dim = w_feat.shape
        ncls = w_pred.shape[1]
        w = jnp.zeros((in_features, self.out_pad), jnp.float32)
        w = w.at[:, :dim].set(w_feat)
        w = w.at[:, dim:dim + ncls].set(w_pred)
        b = jnp.zeros((1, self.out_pad), jnp.float32)
        b = b.at[:, :dim].set(b_feat[None, :])
        b = b.at[:, dim:dim + ncls].set(b_pred[None, :])
        return w, b

    def _dequeue_and_enqueue(self, keys):
        batch_size = keys.shape[0]
        assert self.K % batch_size == 0
        ptr = self.queue_ptr
        # queue[:, ptr:ptr+B] = keys.T  (bf16, pad rows kept zero) — plain-JAX glue
        keys_pad = jnp.zeros((self.out_pad, batch_size), jnp.bfloat16)
        keys_pad = keys_pad.at[:self.dim, :].set(keys.T.astype(jnp.bfloat16))
        self.queue = jax.lax.dynamic_update_slice(self.queue, keys_pad, (0, ptr))
        self.queue_ptr = (ptr + batch_size) % self.K

    def forward(self, inputs):
        im_q = inputs["im_q"]  # NCHW
        im_k = inputs["im_k"]  # NCHW
        n = im_q.shape[0]
        # row-major flatten matches torch.flatten; bf16 feed halves activation DMA
        x_q = im_q.reshape(n, -1).astype(jnp.bfloat16)
        x_k = im_k.reshape(n, -1).astype(jnp.bfloat16)

        out_q, out_k, l_pos, l_neg, wk_new, bk_new = moco_fused_forward(
            x_q, x_k, self.wq_fused, self.bq_fused, self.wk_fused, self.bk_fused,
            self.queue, m=self.m, temperature=self.T, dim=self.dim,
            tk_in=self.tk_in, tn_q=self.tn_q)

        # Persist the momentum-updated key encoder (encoder_k.load_state_dict).
        self.wk_fused, self.bk_fused = wk_new, bk_new

        feat_q = out_q[:, :self.dim]
        pred_q = out_q[:, self.dim:self.dim + self.num_classes]
        feat_k = jax.lax.stop_gradient(out_k[:, :self.dim])   # torch.no_grad branch
        # logits = cat([l_pos, l_neg], 1) / T  — /T already applied in-kernel; the
        # concat is cheap wrapper glue kept off the kernel's lane-dense store path.
        logits = jnp.concatenate([l_pos[:, :1], l_neg], axis=1)
        labels = jnp.zeros((n,), dtype=jnp.int32)

        self._dequeue_and_enqueue(feat_k)
        return pred_q, feat_q, logits, labels


if __name__ == "__main__":
    key = jax.random.PRNGKey(0)
    k_img_q, k_img_k, k_model = jax.random.split(key, 3)

    # small shapes: batch=2, channels=4, spatial=16x16 -> flat features 1024
    N, C, H, W = 2, 4, 16, 16
    NUM_CLASSES = 8
    DIM = 32
    QUEUE_K = 128

    im_q = jax.random.normal(k_img_q, (N, C, H, W), jnp.float32)
    im_k = jax.random.normal(k_img_k, (N, C, H, W), jnp.float32)

    moco = MoCo(k_model, in_features=C * H * W, num_classes=NUM_CLASSES,
                dim=DIM, m=0.8, K=QUEUE_K, T=0.07)

    # f32 reference for the first step, built from the SAME bf16-rounded operands
    # the kernel consumes.  Computed BEFORE the pallas call because wk/bk buffers
    # are donated into the kernel via input_output_aliases.
    xq32 = im_q.reshape(N, -1).astype(jnp.bfloat16).astype(jnp.float32)
    xk32 = im_k.reshape(N, -1).astype(jnp.bfloat16).astype(jnp.float32)
    wq, bq = moco.wq_fused, moco.bq_fused
    wk, bk = moco.wk_fused, moco.bk_fused
    wk_want = wk * (1.0 - moco.m) + wq * moco.m
    bk_want = bk * (1.0 - moco.m) + bq * moco.m
    wq32 = wq.astype(jnp.bfloat16).astype(jnp.float32)
    wk32 = wk_want.astype(jnp.bfloat16).astype(jnp.float32)
    outq_want = xq32 @ wq32 + bq
    outk_want = xk32 @ wk32 + bk_want
    featq_want = outq_want[:, :DIM]
    predq_want = outq_want[:, DIM:DIM + NUM_CLASSES]
    featk_want = outk_want[:, :DIM]
    lpos_want = jnp.sum(featq_want * featk_want, axis=-1, keepdims=True)
    queue32 = moco.queue.astype(jnp.float32)        # (out_pad, K), zero pad rows
    lneg_want = outq_want.astype(jnp.bfloat16).astype(jnp.float32) @ queue32
    logits_want = jnp.concatenate([lpos_want, lneg_want], axis=1) / moco.T
    jax.block_until_ready((wk_want, bk_want, predq_want, featq_want, logits_want))

    pred_q, feat_q, logits, labels = moco.forward({"im_q": im_q, "im_k": im_k})
    jax.block_until_ready((pred_q, feat_q, logits, labels, moco.queue,
                           moco.wk_fused, moco.bk_fused))

    assert pred_q.shape == (N, NUM_CLASSES)
    assert feat_q.shape == (N, DIM)
    assert logits.shape == (N, 1 + QUEUE_K)
    assert labels.shape == (N,)

    # Numerical check vs f32 reference of the bf16-rounded operands.
    assert jnp.allclose(feat_q, featq_want, rtol=0.02, atol=0.02), "feat_q mismatch"
    assert jnp.allclose(pred_q, predq_want, rtol=0.02, atol=0.02), "pred_q mismatch"
    assert jnp.allclose(logits, logits_want, rtol=0.05, atol=0.5), "logits mismatch"
    assert jnp.allclose(moco.wk_fused, wk_want, rtol=1e-5, atol=1e-5), "W_k blend mismatch"
    assert jnp.allclose(moco.bk_fused, bk_want, rtol=1e-5, atol=1e-5), "b_k blend mismatch"

    # Second step exercises the donated key-encoder state + queue enqueue/advance.
    pred_q2, feat_q2, logits2, labels2 = moco.forward({"im_q": im_q, "im_k": im_k})
    jax.block_until_ready((pred_q2, feat_q2, logits2, labels2, moco.queue))
    assert logits2.shape == (N, 1 + QUEUE_K)
    assert moco.queue_ptr == (2 * N) % QUEUE_K

    print("KERNEL_OK")
</pallas_src>

<mosaic_0001>
module attributes {stable_mosaic.version = 11 : i64} {
  func.func @_moco_fused_kernel(%arg0: i32, %arg1: i32, %arg2: memref<2x512xbf16, #tpu.memory_space<vmem>>, %arg3: memref<2x512xbf16, #tpu.memory_space<vmem>>, %arg4: memref<512x128xf32, #tpu.memory_space<vmem>>, %arg5: memref<1x128xf32, #tpu.memory_space<vmem>>, %arg6: memref<512x128xf32, #tpu.memory_space<vmem>>, %arg7: memref<1x128xf32, #tpu.memory_space<vmem>>, %arg8: memref<128x128xbf16, #tpu.memory_space<vmem>>, %arg9: memref<2x128xf32, #tpu.memory_space<vmem>>, %arg10: memref<2x128xf32, #tpu.memory_space<vmem>>, %arg11: memref<2x128xf32, #tpu.memory_space<vmem>>, %arg12: memref<2x128xf32, #tpu.memory_space<vmem>>, %arg13: memref<512x128xf32, #tpu.memory_space<vmem>>, %arg14: memref<1x128xf32, #tpu.memory_space<vmem>>, %arg15: memref<2x128xf32, #tpu.memory_space<vmem>>, %arg16: memref<2x128xf32, #tpu.memory_space<vmem>>) attributes {dimension_semantics = [#tpu.dimension_semantics<arbitrary>, #tpu.dimension_semantics<arbitrary>], iteration_bounds = array<i64: 1, 2>, scalar_prefetch = 0 : i64, scratch_operands = 2 : i64, tpu.core_type = #tpu.core_type<tc>, window_params = [{transform_indices = @transform_0, window_bounds = array<i64: 2, 512>}, {transform_indices = @transform_1, window_bounds = array<i64: 2, 512>}, {transform_indices = @transform_2, window_bounds = array<i64: 512, 128>}, {pipeline_mode = #tpu.pipeline_mode<synchronous>, transform_indices = @transform_3, window_bounds = array<i64: 1, 128>}, {transform_indices = @transform_4, window_bounds = array<i64: 512, 128>}, {pipeline_mode = #tpu.pipeline_mode<synchronous>, transform_indices = @transform_5, window_bounds = array<i64: 1, 128>}, {transform_indices = @transform_6, window_bounds = array<i64: 128, 128>}, {pipeline_mode = #tpu.pipeline_mode<synchronous>, transform_indices = @transform_7, window_bounds = array<i64: 2, 128>}, {pipeline_mode = #tpu.pipeline_mode<synchronous>, transform_indices = @transform_8, window_bounds = array<i64: 2, 128>}, {pipeline_mode = #tpu.pipeline_mode<synchronous>, transform_indices = @transform_9, window_bounds = array<i64: 2, 128>}, {transform_indices = @transform_10, window_bounds = array<i64: 2, 128>}, {transform_indices = @transform_11, window_bounds = array<i64: 512, 128>}, {pipeline_mode = #tpu.pipeline_mode<synchronous>, transform_indices = @transform_12, window_bounds = array<i64: 1, 128>}]} {
    %c0_i32 = arith.constant 0 : i32
    %0 = arith.cmpi eq, %arg0, %c0_i32 : i32
    %c0_i32_0 = arith.constant 0 : i32
    %1 = arith.cmpi eq, %arg1, %c0_i32_0 : i32
    %2 = arith.andi %0, %1 : i1
    %3 = arith.extui %2 : i1 to i32
    %c0_i32_1 = arith.constant 0 : i32
    %4 = arith.cmpi ne, %3, %c0_i32_1 : i32
    scf.if %4 {
      %cst = arith.constant 0.000000e+00 : f32
      %16 = vector.broadcast %cst : f32 to vector<2x128xf32>
      %c0 = arith.constant 0 : index
      %c0_8 = arith.constant 0 : index
      %17 = vector.load %arg15[%c0, %c0_8] : memref<2x128xf32, #tpu.memory_space<vmem>>, vector<2x128xf32>
      tpu.vector_store %arg15[%c0, %c0_8], %16 {strides = array<i32>} : memref<2x128xf32, #tpu.memory_space<vmem>>, vector<2x128xf32>,
      %cst_9 = arith.constant 0.000000e+00 : f32
      %18 = vector.broadcast %cst_9 : f32 to vector<2x128xf32>
      %c0_10 = arith.constant 0 : index
      %c0_11 = arith.constant 0 : index
      %19 = vector.load %arg16[%c0_10, %c0_11] : memref<2x128xf32, #tpu.memory_space<vmem>>, vector<2x128xf32>
      tpu.vector_store %arg16[%c0_10, %c0_11], %18 {strides = array<i32>} : memref<2x128xf32, #tpu.memory_space<vmem>>, vector<2x128xf32>,
      %c0_12 = arith.constant 0 : index
      %c0_13 = arith.constant 0 : index
      %20 = vector.load %arg7[%c0_12, %c0_13] : memref<1x128xf32, #tpu.memory_space<vmem>>, vector<1x128xf32>
      %cst_14 = arith.constant 2.000000e-01 : f32
      %21 = vector.broadcast %cst_14 : f32 to vector<1x128xf32>
      %22 = arith.mulf %20, %21 : vector<1x128xf32>
      %c0_15 = arith.constant 0 : index
      %c0_16 = arith.constant 0 : index
      %23 = vector.load %arg5[%c0_15, %c0_16] : memref<1x128xf32, #tpu.memory_space<vmem>>, vector<1x128xf32>
      %cst_17 = arith.constant 8.000000e-01 : f32
      %24 = vector.broadcast %cst_17 : f32 to vector<1x128xf32>
      %25 = arith.mulf %23, %24 : vector<1x128xf32>
      %26 = arith.addf %22, %25 : vector<1x128xf32>
      %c0_18 = arith.constant 0 : index
      %c0_19 = arith.constant 0 : index
      %27 = vector.load %arg14[%c0_18, %c0_19] : memref<1x128xf32, #tpu.memory_space<vmem>>, vector<1x128xf32>
      tpu.vector_store %arg14[%c0_18, %c0_19], %26 {strides = array<i32>} : memref<1x128xf32, #tpu.memory_space<vmem>>, vector<1x128xf32>,
    } else {
    }
    %c0_i32_2 = arith.constant 0 : i32
    %5 = arith.cmpi eq, %arg0, %c0_i32_2 : i32
    %6 = arith.extui %5 : i1 to i32
    %c0_i32_3 = arith.constant 0 : i32
    %7 = arith.cmpi ne, %6, %c0_i32_3 : i32
    scf.if %7 {
      %c0 = arith.constant 0 : index
      %c0_8 = arith.constant 0 : index
      %16 = vector.load %arg6[%c0, %c0_8] : memref<512x128xf32, #tpu.memory_space<vmem>>, vector<512x128xf32>
      %cst = arith.constant 2.000000e-01 : f32
      %17 = vector.broadcast %cst : f32 to vector<512x128xf32>
      %18 = arith.mulf %16, %17 : vector<512x128xf32>
      %c0_9 = arith.constant 0 : index
      %c0_10 = arith.constant 0 : index
      %19 = vector.load %arg4[%c0_9, %c0_10] : memref<512x128xf32, #tpu.memory_space<vmem>>, vector<512x128xf32>
      %cst_11 = arith.constant 8.000000e-01 : f32
      %20 = vector.broadcast %cst_11 : f32 to vector<512x128xf32>
      %21 = arith.mulf %19, %20 : vector<512x128xf32>
      %22 = arith.addf %18, %21 : vector<512x128xf32>
      %c0_12 = arith.constant 0 : index
      %c0_13 = arith.constant 0 : index
      %23 = vector.load %arg13[%c0_12, %c0_13] : memref<512x128xf32, #tpu.memory_space<vmem>>, vector<512x128xf32>
      tpu.vector_store %arg13[%c0_12, %c0_13], %22 {strides = array<i32>} : memref<512x128xf32, #tpu.memory_space<vmem>>, vector<512x128xf32>,
      %c0_14 = arith.constant 0 : index
      %c0_15 = arith.constant 0 : index
      %24 = vector.load %arg15[%c0_14, %c0_15] : memref<2x128xf32, #tpu.memory_space<vmem>>, vector<2x128xf32>
      %c0_16 = arith.constant 0 : index
      %c0_17 = arith.constant 0 : index
      %25 = vector.load %arg2[%c0_16, %c0_17] : memref<2x512xbf16, #tpu.memory_space<vmem>>, vector<2x512xbf16>
      %c0_18 = arith.constant 0 : index
      %c0_19 = arith.constant 0 : index
      %26 = vector.load %arg4[%c0_18, %c0_19] : memref<512x128xf32, #tpu.memory_space<vmem>>, vector<512x128xf32>
      %27 = arith.truncf %26 : vector<512x128xf32> to vector<512x128xbf16>
      %cst_20 = arith.constant dense<0.000000e+00> : vector<2x128xf32>
      %28 = tpu.matmul %25, %27, %cst_20 {dimension_numbers = #tpu.dot_dimension_numbers<[1], [0], [0], [1], [0, 0, 1, 1], [], []>} : vector<2x512xbf16>, vector<512x128xbf16>, vector<2x128xf32> -> vector<2x128xf32>
      %29 = arith.addf %24, %28 : vector<2x128xf32>
      %c0_21 = arith.constant 0 : index
      %c0_22 = arith.constant 0 : index
      %30 = vector.load %arg15[%c0_21, %c0_22] : memref<2x128xf32, #tpu.memory_space<vmem>>, vector<2x128xf32>
      tpu.vector_store %arg15[%c0_21, %c0_22], %29 {strides = array<i32>} : memref<2x128xf32, #tpu.memory_space<vmem>>, vector<2x128xf32>,
      %c0_23 = arith.constant 0 : index
      %c0_24 = arith.constant 0 : index
      %31 = vector.load %arg16[%c0_23, %c0_24] : memref<2x128xf32, #tpu.memory_space<vmem>>, vector<2x128xf32>
      %c0_25 = arith.constant 0 : index
      %c0_26 = arith.constant 0 : index
      %32 = vector.load %arg3[%c0_25, %c0_26] : memref<2x512xbf16, #tpu.memory_space<vmem>>, vector<2x512xbf16>
      %33 = arith.truncf %22 : vector<512x128xf32> to vector<512x128xbf16>
      %cst_27 = arith.constant dense<0.000000e+00> : vector<2x128xf32>
      %34 = tpu.matmul %32, %33, %cst_27 {dimension_numbers = #tpu.dot_dimension_numbers<[1], [0], [0], [1], [0, 0, 1, 1], [], []>} : vector<2x512xbf16>, vector<512x128xbf16>, vector<2x128xf32> -> vector<2x128xf32>
      %35 = arith.addf %31, %34 : vector<2x128xf32>
      %c0_28 = arith.constant 0 : index
      %c0_29 = arith.constant 0 : index
      %36 = vector.load %arg16[%c0_28, %c0_29] : memref<2x128xf32, #tpu.memory_space<vmem>>, vector<2x128xf32>
      tpu.vector_store %arg16[%c0_28, %c0_29], %35 {strides = array<i32>} : memref<2x128xf32, #tpu.memory_space<vmem>>, vector<2x128xf32>,
    } else {
    }
    %c0_i32_4 = arith.constant 0 : i32
    %8 = arith.cmpi eq, %arg0, %c0_i32_4 : i32
    %c1_i32 = arith.constant 1 : i32
    %9 = arith.cmpi eq, %arg1, %c1_i32 : i32
    %10 = arith.andi %8, %9 : i1
    %11 = arith.extui %10 : i1 to i32
    %c0_i32_5 = arith.constant 0 : i32
    %12 = arith.cmpi ne, %11, %c0_i32_5 : i32
    scf.if %12 {
      %c0 = arith.constant 0 : index
      %c0_8 = arith.constant 0 : index
      %16 = vector.load %arg15[%c0, %c0_8] : memref<2x128xf32, #tpu.memory_space<vmem>>, vector<2x128xf32>
      %c0_9 = arith.constant 0 : index
      %c0_10 = arith.constant 0 : index
      %17 = vector.load %arg5[%c0_9, %c0_10] : memref<1x128xf32, #tpu.memory_space<vmem>>, vector<1x128xf32>
      %18 = vector.broadcast %17 : vector<1x128xf32> to vector<2x128xf32>
      %19 = arith.addf %16, %18 : vector<2x128xf32>
      %c0_11 = arith.constant 0 : index
      %c0_12 = arith.constant 0 : index
      %20 = vector.load %arg16[%c0_11, %c0_12] : memref<2x128xf32, #tpu.memory_space<vmem>>, vector<2x128xf32>
      %c0_13 = arith.constant 0 : index
      %c0_14 = arith.constant 0 : index
      %21 = vector.load %arg7[%c0_13, %c0_14] : memref<1x128xf32, #tpu.memory_space<vmem>>, vector<1x128xf32>
      %cst = arith.constant 2.000000e-01 : f32
      %22 = vector.broadcast %cst : f32 to vector<1x128xf32>
      %23 = arith.mulf %21, %22 : vector<1x128xf32>
      %c0_15 = arith.constant 0 : index
      %c0_16 = arith.constant 0 : index
      %24 = vector.load %arg5[%c0_15, %c0_16] : memref<1x128xf32, #tpu.memory_space<vmem>>, vector<1x128xf32>
      %cst_17 = arith.constant 8.000000e-01 : f32
      %25 = vector.broadcast %cst_17 : f32 to vector<1x128xf32>
      %26 = arith.mulf %24, %25 : vector<1x128xf32>
      %27 = arith.addf %23, %26 : vector<1x128xf32>
      %28 = vector.broadcast %27 : vector<1x128xf32> to vector<2x128xf32>
      %29 = arith.addf %20, %28 : vector<2x128xf32>
      %c0_18 = arith.constant 0 : index
      %c0_19 = arith.constant 0 : index
      %30 = vector.load %arg15[%c0_18, %c0_19] : memref<2x128xf32, #tpu.memory_space<vmem>>, vector<2x128xf32>
      tpu.vector_store %arg15[%c0_18, %c0_19], %19 {strides = array<i32>} : memref<2x128xf32, #tpu.memory_space<vmem>>, vector<2x128xf32>,
      %c0_20 = arith.constant 0 : index
      %c0_21 = arith.constant 0 : index
      %31 = vector.load %arg16[%c0_20, %c0_21] : memref<2x128xf32, #tpu.memory_space<vmem>>, vector<2x128xf32>
      tpu.vector_store %arg16[%c0_20, %c0_21], %29 {strides = array<i32>} : memref<2x128xf32, #tpu.memory_space<vmem>>, vector<2x128xf32>,
      %c0_22 = arith.constant 0 : index
      %c0_23 = arith.constant 0 : index
      %32 = vector.load %arg9[%c0_22, %c0_23] : memref<2x128xf32, #tpu.memory_space<vmem>>, vector<2x128xf32>
      tpu.vector_store %arg9[%c0_22, %c0_23], %19 {strides = array<i32>} : memref<2x128xf32, #tpu.memory_space<vmem>>, vector<2x128xf32>,
      %c0_24 = arith.constant 0 : index
      %c0_25 = arith.constant 0 : index
      %33 = vector.load %arg10[%c0_24, %c0_25] : memref<2x128xf32, #tpu.memory_space<vmem>>, vector<2x128xf32>
      tpu.vector_store %arg10[%c0_24, %c0_25], %29 {strides = array<i32>} : memref<2x128xf32, #tpu.memory_space<vmem>>, vector<2x128xf32>,
      %34 = tpu.iota {dimensions = array<i32: 1>} : vector<2x128xi32>
      %c32_i32 = arith.constant 32 : i32
      %35 = vector.broadcast %c32_i32 : i32 to vector<2x128xi32>
      %36 = arith.cmpi slt, %34, %35 : vector<2x128xi32>
      %37 = arith.extui %36 : vector<2x128xi1> to vector<2x128xi32>
      %38 = arith.sitofp %37 : vector<2x128xi32> to vector<2x128xf32>
      %39 = arith.mulf %19, %29 : vector<2x128xf32>
      %40 = arith.mulf %39, %38 : vector<2x128xf32>
      %cst_26 = arith.constant dense<0.000000e+00> : vector<2xf32>
      %41 = vector.multi_reduction <add>, %40, %cst_26 [1] : vector<2x128xf32> to vector<2xf32>
      %42 = vector.shape_cast %41 : vector<2xf32> to vector<2x1xf32>
      %cst_27 = arith.constant 14.2857141 : f32
      %43 = vector.broadcast %cst_27 : f32 to vector<2x1xf32>
      %44 = arith.mulf %42, %43 : vector<2x1xf32>
      %45 = vector.shape_cast %44 : vector<2x1xf32> to vector<2x1xf32>
      %46 = vector.broadcast %45 : vector<2x1xf32> to vector<2x128xf32>
      %c0_28 = arith.constant 0 : index
      %c0_29 = arith.constant 0 : index
      %47 = vector.load %arg11[%c0_28, %c0_29] : memref<2x128xf32, #tpu.memory_space<vmem>>, vector<2x128xf32>
      tpu.vector_store %arg11[%c0_28, %c0_29], %46 {strides = array<i32>} : memref<2x128xf32, #tpu.memory_space<vmem>>, vector<2x128xf32>,
    } else {
    }
    %c1_i32_6 = arith.constant 1 : i32
    %13 = arith.cmpi eq, %arg1, %c1_i32_6 : i32
    %14 = arith.extui %13 : i1 to i32
    %c0_i32_7 = arith.constant 0 : i32
    %15 = arith.cmpi ne, %14, %c0_i32_7 : i32
    scf.if %15 {
      %c0 = arith.constant 0 : index
      %c0_8 = arith.constant 0 : index
      %16 = vector.load %arg15[%c0, %c0_8] : memref<2x128xf32, #tpu.memory_space<vmem>>, vector<2x128xf32>
      %17 = arith.truncf %16 : vector<2x128xf32> to vector<2x128xbf16>
      %c0_9 = arith.constant 0 : index
      %c0_10 = arith.constant 0 : index
      %18 = vector.load %arg8[%c0_9, %c0_10] : memref<128x128xbf16, #tpu.memory_space<vmem>>, vector<128x128xbf16>
      %cst = arith.constant dense<0.000000e+00> : vector<2x128xf32>
      %19 = tpu.matmul %17, %18, %cst {dimension_numbers = #tpu.dot_dimension_numbers<[1], [0], [0], [1], [0, 0, 1, 1], [], []>} : vector<2x128xbf16>, vector<128x128xbf16>, vector<2x128xf32> -> vector<2x128xf32>
      %cst_11 = arith.constant 14.2857141 : f32
      %20 = vector.broadcast %cst_11 : f32 to vector<2x128xf32>
      %21 = arith.mulf %19, %20 : vector<2x128xf32>
      %c0_12 = arith.constant 0 : index
      %c0_13 = arith.constant 0 : index
      %22 = vector.load %arg12[%c0_12, %c0_13] : memref<2x128xf32, #tpu.memory_space<vmem>>, vector<2x128xf32>
      tpu.vector_store %arg12[%c0_12, %c0_13], %21 {strides = array<i32>} : memref<2x128xf32, #tpu.memory_space<vmem>>, vector<2x128xf32>,
    } else {
    }
    return
  }
  func.func @transform_0(%arg0: i32, %arg1: i32) -> (i32, i32) {
    %c0_i32 = arith.constant 0 : i32
    %0 = arith.cmpi eq, %arg0, %c0_i32 : i32
    %c1_i32 = arith.constant 1 : i32
    %1 = arith.select %0, %arg1, %c1_i32 : i32
    %c0_i32_0 = arith.constant 0 : i32
    %c0_i32_1 = arith.constant 0 : i32
    return %c0_i32_0, %1 : i32, i32
  }
  func.func @transform_1(%arg0: i32, %arg1: i32) -> (i32, i32) {
    %c0_i32 = arith.constant 0 : i32
    %0 = arith.cmpi eq, %arg0, %c0_i32 : i32
    %c1_i32 = arith.constant 1 : i32
    %1 = arith.select %0, %arg1, %c1_i32 : i32
    %c0_i32_0 = arith.constant 0 : i32
    %c0_i32_1 = arith.constant 0 : i32
    return %c0_i32_0, %1 : i32, i32
  }
  func.func @transform_2(%arg0: i32, %arg1: i32) -> (i32, i32) {
    %c0_i32 = arith.constant 0 : i32
    %0 = arith.cmpi eq, %arg0, %c0_i32 : i32
    %c1_i32 = arith.constant 1 : i32
    %1 = arith.select %0, %arg1, %c1_i32 : i32
    %c0_i32_0 = arith.constant 0 : i32
    %c0_i32_1 = arith.constant 0 : i32
    return %1, %c0_i32_0 : i32, i32
  }
  func.func @transform_3(%arg0: i32, %arg1: i32) -> (i32, i32) {
    %c0_i32 = arith.constant 0 : i32
    %c0_i32_0 = arith.constant 0 : i32
    %c0_i32_1 = arith.constant 0 : i32
    return %c0_i32, %c0_i32_0 : i32, i32
  }
  func.func @transform_4(%arg0: i32, %arg1: i32) -> (i32, i32) {
    %c0_i32 = arith.constant 0 : i32
    %0 = arith.cmpi eq, %arg0, %c0_i32 : i32
    %c1_i32 = arith.constant 1 : i32
    %1 = arith.select %0, %arg1, %c1_i32 : i32
    %c0_i32_0 = arith.constant 0 : i32
    %c0_i32_1 = arith.constant 0 : i32
    return %1, %c0_i32_0 : i32, i32
  }
  func.func @transform_5(%arg0: i32, %arg1: i32) -> (i32, i32) {
    %c0_i32 = arith.constant 0 : i32
    %c0_i32_0 = arith.constant 0 : i32
    %c0_i32_1 = arith.constant 0 : i32
    return %c0_i32, %c0_i32_0 : i32, i32
  }
  func.func @transform_6(%arg0: i32, %arg1: i32) -> (i32, i32) {
    %c0_i32 = arith.constant 0 : i32
    %c0_i32_0 = arith.constant 0 : i32
    return %c0_i32, %arg0 : i32, i32
  }
  func.func @transform_7(%arg0: i32, %arg1: i32) -> (i32, i32) {
    %c0_i32 = arith.constant 0 : i32
    %c0_i32_0 = arith.constant 0 : i32
    %c0_i32_1 = arith.constant 0 : i32
    return %c0_i32, %c0_i32_0 : i32, i32
  }
  func.func @transform_8(%arg0: i32, %arg1: i32) -> (i32, i32) {
    %c0_i32 = arith.constant 0 : i32
    %c0_i32_0 = arith.constant 0 : i32
    %c0_i32_1 = arith.constant 0 : i32
    return %c0_i32, %c0_i32_0 : i32, i32
  }
  func.func @transform_9(%arg0: i32, %arg1: i32) -> (i32, i32) {
    %c0_i32 = arith.constant 0 : i32
    %c0_i32_0 = arith.constant 0 : i32
    %c0_i32_1 = arith.constant 0 : i32
    return %c0_i32, %c0_i32_0 : i32, i32
  }
  func.func @transform_10(%arg0: i32, %arg1: i32) -> (i32, i32) {
    %c0_i32 = arith.constant 0 : i32
    %c0_i32_0 = arith.constant 0 : i32
    return %c0_i32, %arg0 : i32, i32
  }
  func.func @transform_11(%arg0: i32, %arg1: i32) -> (i32, i32) {
    %c0_i32 = arith.constant 0 : i32
    %0 = arith.cmpi eq, %arg0, %c0_i32 : i32
    %c1_i32 = arith.constant 1 : i32
    %1 = arith.select %0, %arg1, %c1_i32 : i32
    %c0_i32_0 = arith.constant 0 : i32
    %c0_i32_1 = arith.constant 0 : i32
    return %1, %c0_i32_0 : i32, i32
  }
  func.func @transform_12(%arg0: i32, %arg1: i32) -> (i32, i32) {
    %c0_i32 = arith.constant 0 : i32
    %c0_i32_0 = arith.constant 0 : i32
    %c0_i32_1 = arith.constant 0 : i32
    return %c0_i32, %c0_i32_0 : i32, i32
  }
}

</mosaic_0001>

<llo_original>
// kernel: tpu_custom_call.1
$region0: #{tpu_custom_call.1}
  #allocation0 [shape = 'u32[]', space=smem, size = 0x4, offset = 0x4, fixed_abs, tag = 'smem constant byte address 0x4 - core index']
  #allocation1 [shape = 'u32[72,128]{1,0:T(1,128)}', space=vmem, size = 0x9000, scoped, tag = 'internal scratch']
  #allocation2 [shape = 'f32[2,128]{1,0:T(2,128)}', space=vmem, size = 0x400, scoped, tag = 'scratch operand']
  #allocation3 [shape = 'f32[2,128]{1,0:T(2,128)}', space=vmem, size = 0x400, scoped, tag = 'scratch operand']
  %s0 = inlined_call_operand.vmem [shape: bf16[2,1024], index: 0, kind: input, shape index: {}]
  %s1 = inlined_call_operand.vmem [shape: bf16[2,1024], index: 1, kind: input, shape index: {}]
  %s2 = inlined_call_operand.vmem [shape: f32[1024,128], index: 2, kind: input, shape index: {}]
  %s3 = inlined_call_operand.vmem [shape: f32[1,128], index: 3, kind: input, shape index: {}]
  %s4 = inlined_call_operand.hbm [shape: f32[1024,128], index: 4, kind: input, shape index: {}, may-alias: {4,11}]
  %s5 = inlined_call_operand.hbm [shape: f32[1,128], index: 5, kind: input, shape index: {}, may-alias: {5,12}]
  %s6 = inlined_call_operand.vmem [shape: bf16[128,128], index: 6, kind: input, shape index: {}]
  %s7 = inlined_call_operand.hbm [shape: f32[2,128], index: 7, kind: output, shape index: {0}]
  %s8 = inlined_call_operand.hbm [shape: f32[2,128], index: 8, kind: output, shape index: {1}]
  %s9 = inlined_call_operand.hbm [shape: f32[2,128], index: 9, kind: output, shape index: {2}]
  %s10 = inlined_call_operand.hbm [shape: f32[2,128], index: 10, kind: output, shape index: {3}]
  %s11 = inlined_call_operand.hbm [shape: f32[1024,128], index: 11, kind: output, shape index: {4}, may-alias: {4,11}]
  %s12 = inlined_call_operand.hbm [shape: f32[1,128], index: 12, kind: output, shape index: {5}, may-alias: {5,12}]
  %13 = xla_tuple %s7, %s8, %s9, %s10, %s11, %s12
  %s14 = sld [smem:[#allocation0]]
  $region125: #{tpu_custom_call.1} parent=0
    _
  %s16 = ssub.s32 1, %s14
  %s17 = scalar_select 0, %s16, %s14
  $region1: #{tpu_custom_call.1} parent=0
    #allocation4 [shape = 'u8[524288]{0}', space=vmem, size = 0x80000, scoped, tag = 'input window, operand 4']
    #allocation5 [shape = 's32[2]{0}', space=sflag, size = 0x8, scoped, tag = 'scoped memory for tpu_custom_call.1']
    #allocation6 [shape = 's32[2]{0}', space=sflag, size = 0x8, scoped, tag = 'scoped memory for tpu_custom_call.1']
    #allocation7 [shape = 'u8[512]{0}', space=vmem, size = 0x400, scoped, tag = 'input window, operand 5, single buffered']
    #allocation8 [shape = 's32[1]{0}', space=sflag, size = 0x4, scoped, tag = 'scoped memory for tpu_custom_call.1']
    #allocation9 [shape = 'u8[1024]{0}', space=vmem, size = 0x400, scoped, tag = 'output window, operand 0, single buffered']
    #allocation10 [shape = 'u8[1024]{0}', space=vmem, size = 0x400, scoped, tag = 'output window, operand 1, single buffered']
    #allocation11 [shape = 's32[1]{0}', space=sflag, size = 0x4, scoped, tag = 'scoped memory for tpu_custom_call.1']
    #allocation12 [shape = 'u8[1024]{0}', space=vmem, size = 0x400, scoped, tag = 'output window, operand 2, single buffered']
    #allocation13 [shape = 'u8[1024]{0}', space=vmem, size = 0x400, scoped, tag = 'output window, operand 3, single buffered']
    #allocation14 [shape = 's32[1]{0}', space=sflag, size = 0x4, scoped, tag = 'scoped memory for tpu_custom_call.1']
    #allocation15 [shape = 'u8[524288]{0}', space=vmem, size = 0x80000, scoped, tag = 'output window, operand 4']
    #allocation16 [shape = 'u8[512]{0}', space=vmem, size = 0x400, scoped, tag = 'output window, operand 5, single buffered']
    %18 = vsyncpa [#allocation5], 0
    %s19 = scalar_lea.sflag [#allocation5], 1
    %20 = vsyncpa %s19, 0
    %21 = vsyncpa [#allocation8], 0
    %22 = vsyncpa [#allocation6], 0
    %23 = vsyncpa [#allocation11], 0
    %24 = vsyncpa [#allocation14], 0
    loop: start=0, step=1, limit=4
    $region2: #{tpu_custom_call.1} parent=1 // loop_pre_header
      _
    $region3: #{tpu_custom_call.1} parent=1 // loop_header
      %s26 = sphi 0, %s30
      %p27 = scmp.ge.s32.totalorder %s26, 4
      %s33 = sphi 0, %s45
      %s34 = sphi 0, %s41
      %s35 = sphi 0, %s33
      %s36 = sphi 0, %s34
      %s37 = sphi 0, %s35
      %s38 = sphi 0, %s36
      %s52 = sphi 0, %s54
      %s55 = sphi 0, %s52
      %s56 = sphi 0, %s55
      %s72 = sphi 0, %s56
      %s82 = sphi 0, %s84
      %s85 = sphi 0, %s82
      %s86 = sphi 0, %s85
      %s102 = sphi 0, %s86
      %s112 = sphi 0, %s114
      %s115 = sphi 0, %s112
      %s116 = sphi 0, %s115
      %s132 = sphi 0, %s116
      %s136 = sphi 0, %s136
      %s138 = sphi 0, %s136
      %s139 = sphi 0, %s138
      %s153 = sphi 0, %s139
      %s163 = sphi 0, %s165
      %s166 = sphi 0, %s163
      %s167 = sphi 0, %s166
      %s183 = sphi 0, %s167
      %s187 = sphi 0, %s187
      %s189 = sphi 0, %s187
      %s190 = sphi 0, %s189
      %s204 = sphi 0, %s190
      %s210 = sphi 0, %s212
      %s213 = sphi 0, %s210
      %s214 = sphi 0, %s213
      %s230 = sphi 0, %s214
      %s234 = sphi 0, %s234
      %s236 = sphi 0, %s234
      %s237 = sphi 0, %s236
      %s251 = sphi 0, %s237
      %s255 = sphi 0, %s255
      %s257 = sphi 0, %s255
      %s258 = sphi 0, %s257
      %s272 = sphi 0, %s258
      %s276 = sphi 0, %s276
      %s278 = sphi 0, %s276
      %s279 = sphi 0, %s278
      %s293 = sphi 0, %s279
      %s299 = sphi 0, %s301
      %s302 = sphi 0, %s299
      %s303 = sphi 0, %s302
      %s319 = sphi 0, %s303
      %s329 = sphi 0, %s331
      %s332 = sphi 0, %s329
      %s333 = sphi 0, %s332
      %s349 = sphi 0, %s333
      %s353 = sphi 0, %s353
      %s355 = sphi 0, %s353
      %s356 = sphi 0, %s355
      %s370 = sphi 0, %s356
    $region4: #{tpu_custom_call.1} parent=1 // loop_header_branch
      %29 = sbr.rel (%p27) target = $region8
    $region5: #{tpu_custom_call.1} parent=1 // loop_body
      %s31 = ssub.s32 %s26, 1
      %s32 = ssub.s32 %s26, 2
      %s39 = sadd.s32 1, %s34
      %p40 = scmp.ge.s32.totalorder %s39, 2
      %s41 = scalar_select %p40, 0, %s39
      %s42 = sadd.s32 1, %s33
      %s43 = scalar_select %p40, %s42, %s33
      %p44 = scmp.ge.s32.totalorder %s43, 1
      %s45 = scalar_select %p44, 0, %s43
      %p46 = scmp.eq.s32.totalorder %s33, 0
      %s47 = scalar_select %p46, %s34, 1
      %p48 = scmp.eq.s32.totalorder %s45, 0
      %s49 = scalar_select %p48, %s41, 1
      %s50 = ssub.s32 %s47, %s49
      %p51 = scmp.eq.s32.totalorder %s50, 0
      %s53 = sadd.s32 %s52, 1
      %s54 = scalar_select %p51, %s52, %s53
      %p57 = pneg %p51
      %p58 = scmp.eq.s32.totalorder %s26, 1
      %p59 = por %p57, %p58
      %p60 = scmp.ne.s32.totalorder %s52, %s55
      %p61 = scmp.eq.s32.totalorder %s26, 0
      %p62 = por %p60, %p61
      %p63 = scmp.ne.s32.totalorder %s52, %s55
      %p64 = scmp.eq.s32.totalorder %s31, 1
      %p65 = por %p63, %p64
      %p66 = scmp.ne.s32.totalorder %s55, %s56
      %p67 = scmp.eq.s32.totalorder %s31, 0
      %p68 = por %p66, %p67
      %p69 = scmp.ne.s32.totalorder %s55, %s56
      %p70 = scmp.eq.s32.totalorder %s32, 1
      %p71 = por %p69, %p70
      %p73 = scmp.ne.s32.totalorder %s56, %s72
      %p74 = scmp.eq.s32.totalorder %s32, 0
      %p75 = por %p73, %p74
      %p76 = scmp.eq.s32.totalorder %s33, 0
      %s77 = scalar_select %p76, %s34, 1
      %p78 = scmp.eq.s32.totalorder %s45, 0
      %s79 = scalar_select %p78, %s41, 1
      %s80 = ssub.s32 %s77, %s79
      %p81 = scmp.eq.s32.totalorder %s80, 0
      %s83 = sadd.s32 %s82, 1
      %s84 = scalar_select %p81, %s82, %s83
      %p87 = pneg %p81
      %p88 = scmp.eq.s32.totalorder %s26, 1
      %p89 = por %p87, %p88
      %p90 = scmp.ne.s32.totalorder %s82, %s85
      %p91 = scmp.eq.s32.totalorder %s26, 0
      %p92 = por %p90, %p91
      %p93 = scmp.ne.s32.totalorder %s82, %s85
      %p94 = scmp.eq.s32.totalorder %s31, 1
      %p95 = por %p93, %p94
      %p96 = scmp.ne.s32.totalorder %s85, %s86
      %p97 = scmp.eq.s32.totalorder %s31, 0
      %p98 = por %p96, %p97
      %p99 = scmp.ne.s32.totalorder %s85, %s86
      %p100 = scmp.eq.s32.totalorder %s32, 1
      %p101 = por %p99, %p100
      %p103 = scmp.ne.s32.totalorder %s86, %s102
      %p104 = scmp.eq.s32.totalorder %s32, 0
      %p105 = por %p103, %p104
      %p106 = scmp.eq.s32.totalorder %s33, 0
      %s107 = scalar_select %p106, %s34, 1
      %p108 = scmp.eq.s32.totalorder %s45, 0
      %s109 = scalar_select %p108, %s41, 1
      %s110 = ssub.s32 %s107, %s109
      %p111 = scmp.eq.s32.totalorder %s110, 0
      %s113 = sadd.s32 %s112, 1
      %s114 = scalar_select %p111, %s112, %s113
      %p117 = pneg %p111
      %p118 = scmp.eq.s32.totalorder %s26, 1
      %p119 = por %p117, %p118
      %p120 = scmp.ne.s32.totalorder %s112, %s115
      %p121 = scmp.eq.s32.totalorder %s26, 0
      %p122 = por %p120, %p121
      %p123 = scmp.ne.s32.totalorder %s112, %s115
      %p124 = scmp.eq.s32.totalorder %s31, 1
      %p125 = por %p123, %p124
      %p126 = scmp.ne.s32.totalorder %s115, %s116
      %p127 = scmp.eq.s32.totalorder %s31, 0
      %p128 = por %p126, %p127
      %p129 = scmp.ne.s32.totalorder %s115, %s116
      %p130 = scmp.eq.s32.totalorder %s32, 1
      %p131 = por %p129, %p130
      %p133 = scmp.ne.s32.totalorder %s116, %s132
      %p134 = scmp.eq.s32.totalorder %s32, 0
      %p135 = por %p133, %p134
      %s137 = sadd.s32 %s136, 1
      %p140 = scmp.eq.s32.totalorder %s26, 1
      %p141 = scmp.ne.s32.totalorder %s136, %s138
      %p142 = scmp.eq.s32.totalorder %s26, 0
      %p143 = por %p141, %p142
      %p144 = scmp.ne.s32.totalorder %s136, %s138
      %p145 = scmp.eq.s32.totalorder %s31, 1
      %p146 = por %p144, %p145
      %p147 = scmp.ne.s32.totalorder %s138, %s139
      %p148 = scmp.eq.s32.totalorder %s31, 0
      %p149 = por %p147, %p148
      %p150 = scmp.ne.s32.totalorder %s138, %s139
      %p151 = scmp.eq.s32.totalorder %s32, 1
      %p152 = por %p150, %p151
      %p154 = scmp.ne.s32.totalorder %s139, %s153
      %p155 = scmp.eq.s32.totalorder %s32, 0
      %p156 = por %p154, %p155
      %p157 = scmp.eq.s32.totalorder %s33, 0
      %s158 = scalar_select %p157, %s34, 1
      %p159 = scmp.eq.s32.totalorder %s45, 0
      %s160 = scalar_select %p159, %s41, 1
      %s161 = ssub.s32 %s158, %s160
      %p162 = scmp.eq.s32.totalorder %s161, 0
      %s164 = sadd.s32 %s163, 1
      %s165 = scalar_select %p162, %s163, %s164
      %p168 = pneg %p162
      %p169 = scmp.eq.s32.totalorder %s26, 1
      %p170 = por %p168, %p169
      %p171 = scmp.ne.s32.totalorder %s163, %s166
      %p172 = scmp.eq.s32.totalorder %s26, 0
      %p173 = por %p171, %p172
      %p174 = scmp.ne.s32.totalorder %s163, %s166
      %p175 = scmp.eq.s32.totalorder %s31, 1
      %p176 = por %p174, %p175
      %p177 = scmp.ne.s32.totalorder %s166, %s167
      %p178 = scmp.eq.s32.totalorder %s31, 0
      %p179 = por %p177, %p178
      %p180 = scmp.ne.s32.totalorder %s166, %s167
      %p181 = scmp.eq.s32.totalorder %s32, 1
      %p182 = por %p180, %p181
      %p184 = scmp.ne.s32.totalorder %s167, %s183
      %p185 = scmp.eq.s32.totalorder %s32, 0
      %p186 = por %p184, %p185
      %s188 = sadd.s32 %s187, 1
      %p191 = scmp.eq.s32.totalorder %s26, 1
      %p192 = scmp.ne.s32.totalorder %s187, %s189
      %p193 = scmp.eq.s32.totalorder %s26, 0
      %p194 = por %p192, %p193
      %p195 = scmp.ne.s32.totalorder %s187, %s189
      %p196 = scmp.eq.s32.totalorder %s31, 1
      %p197 = por %p195, %p196
      %p198 = scmp.ne.s32.totalorder %s189, %s190
      %p199 = scmp.eq.s32.totalorder %s31, 0
      %p200 = por %p198, %p199
      %p201 = scmp.ne.s32.totalorder %s189, %s190
      %p202 = scmp.eq.s32.totalorder %s32, 1
      %p203 = por %p201, %p202
      %p205 = scmp.ne.s32.totalorder %s190, %s204
      %p206 = scmp.eq.s32.totalorder %s32, 0
      %p207 = por %p205, %p206
      %s208 = ssub.s32 %s33, %s45
      %p209 = scmp.eq.s32.totalorder %s208, 0
      %s211 = sadd.s32 %s210, 1
      %s212 = scalar_select %p209, %s210, %s211
      %p215 = pneg %p209
      %p216 = scmp.eq.s32.totalorder %s26, 1
      %p217 = por %p215, %p216
      %p218 = scmp.ne.s32.totalorder %s210, %s213
      %p219 = scmp.eq.s32.totalorder %s26, 0
      %p220 = por %p218, %p219
      %p221 = scmp.ne.s32.totalorder %s210, %s213
      %p222 = scmp.eq.s32.totalorder %s31, 1
      %p223 = por %p221, %p222
      %p224 = scmp.ne.s32.totalorder %s213, %s214
      %p225 = scmp.eq.s32.totalorder %s31, 0
      %p226 = por %p224, %p225
      %p227 = scmp.ne.s32.totalorder %s213, %s214
      %p228 = scmp.eq.s32.totalorder %s32, 1
      %p229 = por %p227, %p228
      %p231 = scmp.ne.s32.totalorder %s214, %s230
      %p232 = scmp.eq.s32.totalorder %s32, 0
      %p233 = por %p231, %p232
      %s235 = sadd.s32 %s234, 1
      %p238 = scmp.eq.s32.totalorder %s26, 1
      %p239 = scmp.ne.s32.totalorder %s234, %s236
      %p240 = scmp.eq.s32.totalorder %s26, 0
      %p241 = por %p239, %p240
      %p242 = scmp.ne.s32.totalorder %s234, %s236
      %p243 = scmp.eq.s32.totalorder %s31, 1
      %p244 = por %p242, %p243
      %p245 = scmp.ne.s32.totalorder %s236, %s237
      %p246 = scmp.eq.s32.totalorder %s31, 0
      %p247 = por %p245, %p246
      %p248 = scmp.ne.s32.totalorder %s236, %s237
      %p249 = scmp.eq.s32.totalorder %s32, 1
      %p250 = por %p248, %p249
      %p252 = scmp.ne.s32.totalorder %s237, %s251
      %p253 = scmp.eq.s32.totalorder %s32, 0
      %p254 = por %p252, %p253
      %s256 = sadd.s32 %s255, 1
      %p259 = scmp.eq.s32.totalorder %s26, 1
      %p260 = scmp.ne.s32.totalorder %s255, %s257
      %p261 = scmp.eq.s32.totalorder %s26, 0
      %p262 = por %p260, %p261
      %p263 = scmp.ne.s32.totalorder %s255, %s257
      %p264 = scmp.eq.s32.totalorder %s31, 1
      %p265 = por %p263, %p264
      %p266 = scmp.ne.s32.totalorder %s257, %s258
      %p267 = scmp.eq.s32.totalorder %s31, 0
      %p268 = por %p266, %p267
      %p269 = scmp.ne.s32.totalorder %s257, %s258
      %p270 = scmp.eq.s32.totalorder %s32, 1
      %p271 = por %p269, %p270
      %p273 = scmp.ne.s32.totalorder %s258, %s272
      %p274 = scmp.eq.s32.totalorder %s32, 0
      %p275 = por %p273, %p274
      %s277 = sadd.s32 %s276, 1
      %p280 = scmp.eq.s32.totalorder %s26, 1
      %p281 = scmp.ne.s32.totalorder %s276, %s278
      %p282 = scmp.eq.s32.totalorder %s26, 0
      %p283 = por %p281, %p282
      %p284 = scmp.ne.s32.totalorder %s276, %s278
      %p285 = scmp.eq.s32.totalorder %s31, 1
      %p286 = por %p284, %p285
      %p287 = scmp.ne.s32.totalorder %s278, %s279
      %p288 = scmp.eq.s32.totalorder %s31, 0
      %p289 = por %p287, %p288
      %p290 = scmp.ne.s32.totalorder %s278, %s279
      %p291 = scmp.eq.s32.totalorder %s32, 1
      %p292 = por %p290, %p291
      %p294 = scmp.ne.s32.totalorder %s279, %s293
      %p295 = scmp.eq.s32.totalorder %s32, 0
      %p296 = por %p294, %p295
      %s297 = ssub.s32 %s33, %s45
      %p298 = scmp.eq.s32.totalorder %s297, 0
      %s300 = sadd.s32 %s299, 1
      %s301 = scalar_select %p298, %s299, %s300
      %p304 = pneg %p298
      %p305 = scmp.eq.s32.totalorder %s26, 1
      %p306 = por %p304, %p305
      %p307 = scmp.ne.s32.totalorder %s299, %s302
      %p308 = scmp.eq.s32.totalorder %s26, 0
      %p309 = por %p307, %p308
      %p310 = scmp.ne.s32.totalorder %s299, %s302
      %p311 = scmp.eq.s32.totalorder %s31, 1
      %p312 = por %p310, %p311
      %p313 = scmp.ne.s32.totalorder %s302, %s303
      %p314 = scmp.eq.s32.totalorder %s31, 0
      %p315 = por %p313, %p314
      %p316 = scmp.ne.s32.totalorder %s302, %s303
      %p317 = scmp.eq.s32.totalorder %s32, 1
      %p318 = por %p316, %p317
      %p320 = scmp.ne.s32.totalorder %s303, %s319
      %p321 = scmp.eq.s32.totalorder %s32, 0
      %p322 = por %p320, %p321
      %p323 = scmp.eq.s32.totalorder %s33, 0
      %s324 = scalar_select %p323, %s34, 1
      %p325 = scmp.eq.s32.totalorder %s45, 0
      %s326 = scalar_select %p325, %s41, 1
      %s327 = ssub.s32 %s324, %s326
      %p328 = scmp.eq.s32.totalorder %s327, 0
      %s330 = sadd.s32 %s329, 1
      %s331 = scalar_select %p328, %s329, %s330
      %p334 = pneg %p328
      %p335 = scmp.eq.s32.totalorder %s26, 1
      %p336 = por %p334, %p335
      %p337 = scmp.ne.s32.totalorder %s329, %s332
      %p338 = scmp.eq.s32.totalorder %s26, 0
      %p339 = por %p337, %p338
      %p340 = scmp.ne.s32.totalorder %s329, %s332
      %p341 = scmp.eq.s32.totalorder %s31, 1
      %p342 = por %p340, %p341
      %p343 = scmp.ne.s32.totalorder %s332, %s333
      %p344 = scmp.eq.s32.totalorder %s31, 0
      %p345 = por %p343, %p344
      %p346 = scmp.ne.s32.totalorder %s332, %s333
      %p347 = scmp.eq.s32.totalorder %s32, 1
      %p348 = por %p346, %p347
      %p350 = scmp.ne.s32.totalorder %s333, %s349
      %p351 = scmp.eq.s32.totalorder %s32, 0
      %p352 = por %p350, %p351
      %s354 = sadd.s32 %s353, 1
      %p357 = scmp.eq.s32.totalorder %s26, 1
      %p358 = scmp.ne.s32.totalorder %s353, %s355
      %p359 = scmp.eq.s32.totalorder %s26, 0
      %p360 = por %p358, %p359
      %p361 = scmp.ne.s32.totalorder %s353, %s355
      %p362 = scmp.eq.s32.totalorder %s31, 1
      %p363 = por %p361, %p362
      %p364 = scmp.ne.s32.totalorder %s355, %s356
      %p365 = scmp.eq.s32.totalorder %s31, 0
      %p366 = por %p364, %p365
      %p367 = scmp.ne.s32.totalorder %s355, %s356
      %p368 = scmp.eq.s32.totalorder %s32, 1
      %p369 = por %p367, %p368
      %p371 = scmp.ne.s32.totalorder %s356, %s370
      %p372 = scmp.eq.s32.totalorder %s32, 0
      %p373 = por %p371, %p372
      %p374 = scmp.le.s32.totalorder 1, %s26
      %p375 = scmp.lt.s32.totalorder %s26, 3
      %p376 = pnand %p374, %p375
      %p377 = pneg %p376
      // Predicated region
      $region9: #{tpu_custom_call.1} parent=5 // pred_check
        _
      $region10: #{tpu_custom_call.1} parent=5 // pred_check_branch
        %379 = sbr.rel (%p376) target = $region12
      $region11: #{tpu_custom_call.1} parent=5 // pred_region
        %s380 = ssub.s32 %s26, 1
        // Predicated region
        $region13: #{tpu_custom_call.1} parent=11 // pred_check
          %p381 = pneg %p149
        $region14: #{tpu_custom_call.1} parent=11 // pred_check_branch
          %383 = sbr.rel (%p381) target = $region16
        $region15: #{tpu_custom_call.1} parent=11 // pred_region
          _
        $region16: #{tpu_custom_call.1} parent=11 // pred_fallthru
          _
        // Predicated region
        $region17: #{tpu_custom_call.1} parent=11 // pred_check
          %p384 = pneg %p200
        $region18: #{tpu_custom_call.1} parent=11 // pred_check_branch
          %386 = sbr.rel (%p384) target = $region20
        $region19: #{tpu_custom_call.1} parent=11 // pred_region
          %388 = vsyncadd [#allocation8], 0
          %s390 = sshll.u32 %s5, 4
          %s391 = int_to_ptr.hbm [resolvable:$true] %s390
          %s392 = sshll.u32 [#allocation7], 4
          %s393 = int_to_ptr.vmem [resolvable:$true] %s392
          %395 = dma.hbm_to_vmem [thread:$0]  %s391, 16, %s393, [#allocation8]
        $region20: #{tpu_custom_call.1} parent=11 // pred_fallthru
          _
        // Predicated region
        $region21: #{tpu_custom_call.1} parent=11 // pred_check
          %p396 = pneg %p226
        $region22: #{tpu_custom_call.1} parent=11 // pred_check_branch
          %398 = sbr.rel (%p396) target = $region24
        $region23: #{tpu_custom_call.1} parent=11 // pred_region
          %p399 = scmp.lt.s32.totalorder %s35, 0
          %s400 = scalar_select %p399, %s35, 0
          %s401 = smul.addr %s400, 4
          %s402 = scalar_lea.vmem %s6, %s401
        $region24: #{tpu_custom_call.1} parent=11 // pred_fallthru
          _
      $region12: #{tpu_custom_call.1} parent=5 // pred_fallthru
        _
      %p403 = scmp.lt.s32.totalorder %s26, 2
      // Predicated region
      $region25: #{tpu_custom_call.1} parent=5 // pred_check
        %p404 = pneg %p403
      $region26: #{tpu_custom_call.1} parent=5 // pred_check_branch
        %406 = sbr.rel (%p404) target = $region28
      $region27: #{tpu_custom_call.1} parent=5 // pred_region
        // Predicated region
        $region29: #{tpu_custom_call.1} parent=27 // pred_check
          %p407 = pneg %p62
        $region30: #{tpu_custom_call.1} parent=27 // pred_check_branch
          %409 = sbr.rel (%p407) target = $region32
        $region31: #{tpu_custom_call.1} parent=27 // pred_region
          %p410 = scmp.eq.s32.totalorder %s33, 0
          %s411 = scalar_select %p410, %s34, 1
          %s412 = smul.u32 4, %s411
          %p413 = scmp.lt.s32.totalorder %s412, 7
          %s414 = scalar_select %p413, %s412, 7
          %s415 = scalar_lea.vmem %s0, %s414
          %p416 = scmp.eq.s32.totalorder %s33, 0
          %s417 = scalar_select %p416, %s34, 1
          %s418 = smul.u32 4, %s417
        $region32: #{tpu_custom_call.1} parent=27 // pred_fallthru
          _
        // Predicated region
        $region33: #{tpu_custom_call.1} parent=27 // pred_check
          %p419 = pneg %p92
        $region34: #{tpu_custom_call.1} parent=27 // pred_check_branch
          %421 = sbr.rel (%p419) target = $region36
        $region35: #{tpu_custom_call.1} parent=27 // pred_region
          %p422 = scmp.eq.s32.totalorder %s33, 0
          %s423 = scalar_select %p422, %s34, 1
          %s424 = smul.u32 4, %s423
          %p425 = scmp.lt.s32.totalorder %s424, 7
          %s426 = scalar_select %p425, %s424, 7
          %s427 = scalar_lea.vmem %s1, %s426
          %p428 = scmp.eq.s32.totalorder %s33, 0
          %s429 = scalar_select %p428, %s34, 1
          %s430 = smul.u32 4, %s429
        $region36: #{tpu_custom_call.1} parent=27 // pred_fallthru
          _
        // Predicated region
        $region37: #{tpu_custom_call.1} parent=27 // pred_check
          %p431 = pneg %p122
        $region38: #{tpu_custom_call.1} parent=27 // pred_check_branch
          %433 = sbr.rel (%p431) target = $region40
        $region39: #{tpu_custom_call.1} parent=27 // pred_region
          %p434 = scmp.eq.s32.totalorder %s33, 0
          %s435 = scalar_select %p434, %s34, 1
          %s436 = smul.u32 64, %s435
          %p437 = scmp.lt.s32.totalorder %s436, 127
          %s438 = scalar_select %p437, %s436, 127
          %s439 = smul.addr %s438, 8
          %s440 = scalar_lea.vmem %s2, %s439
          %p441 = scmp.eq.s32.totalorder %s33, 0
          %s442 = scalar_select %p441, %s34, 1
          %s443 = smul.u32 64, %s442
        $region40: #{tpu_custom_call.1} parent=27 // pred_fallthru
          _
        // Predicated region
        $region41: #{tpu_custom_call.1} parent=27 // pred_check
          %p444 = pneg %p173
        $region42: #{tpu_custom_call.1} parent=27 // pred_check_branch
          %446 = sbr.rel (%p444) target = $region44
        $region43: #{tpu_custom_call.1} parent=27 // pred_region
          %s447 = sand.u32 %s163, 1
          %s448 = scalar_lea.sflag [#allocation5], %s447
          %s449 = sand.u32 %s163, 1
          %s450 = smul.addr %s449, 512
          %s451 = scalar_lea.vmem [#allocation4], %s450
          %p452 = scmp.eq.s32.totalorder %s33, 0
          %s453 = scalar_select %p452, %s34, 1
          %s454 = smul.u32 64, %s453
          %456 = vsyncadd %s448, 0
          %s457 = smul.addr %s454, 8
          %s458 = scalar_lea.hbm %s4, %s457
          %s459 = sshll.u32 %s458, 4
          %s460 = int_to_ptr.hbm [resolvable:$true] %s459
          %s461 = sshll.u32 %s451, 4
          %s462 = int_to_ptr.vmem [resolvable:$true] %s461
          %467 = dma.hbm_to_vmem [thread:$0]  %s460, 8192, %s462, %s448, 128, 128, 8
        $region44: #{tpu_custom_call.1} parent=27 // pred_fallthru
          _
      $region28: #{tpu_custom_call.1} parent=5 // pred_fallthru
        _
      %p468 = scmp.le.s32.totalorder 1, %s26
      %p469 = scmp.lt.s32.totalorder %s26, 3
      %p470 = pnand %p468, %p469
      %p471 = pneg %p470
      // Predicated region
      $region45: #{tpu_custom_call.1} parent=5 // pred_check
        _
      $region46: #{tpu_custom_call.1} parent=5 // pred_check_branch
        %473 = sbr.rel (%p470) target = $region48
      $region47: #{tpu_custom_call.1} parent=5 // pred_region
        %s474 = ssub.s32 %s26, 1
        %s475 = sand.u32 %s166, 1
        %s476 = scalar_lea.sflag [#allocation5], %s475
        %s477 = sand.u32 %s166, 1
        %s478 = smul.addr %s477, 512
        %s479 = scalar_lea.vmem [#allocation4], %s478
        // Predicated region
        $region49: #{tpu_custom_call.1} parent=47 // pred_check
          %p480 = pneg %p179
        $region50: #{tpu_custom_call.1} parent=47 // pred_check_branch
          %482 = sbr.rel (%p480) target = $region52
        $region51: #{tpu_custom_call.1} parent=47 // pred_region
          %484 = dma.done %s476, 8192
        $region52: #{tpu_custom_call.1} parent=47 // pred_fallthru
          _
        // Predicated region
        $region53: #{tpu_custom_call.1} parent=47 // pred_check
          %p485 = pneg %p200
        $region54: #{tpu_custom_call.1} parent=47 // pred_check_branch
          %487 = sbr.rel (%p485) target = $region56
        $region55: #{tpu_custom_call.1} parent=47 // pred_region
          %489 = dma.done [#allocation8], 16
        $region56: #{tpu_custom_call.1} parent=47 // pred_fallthru
          _
        %p490 = scmp.eq.s32.totalorder %s35, 0
        %s491 = scalar_select %p490, %s36, 1
        %s492 = smul.u32 4, %s491
        %p493 = scmp.lt.s32.totalorder %s492, 7
        %s494 = scalar_select %p493, %s492, 7
        %s495 = scalar_lea.vmem %s0, %s494
        %p496 = pneg %p68
        %p497 = pneg %p65
        %p498 = scmp.eq.s32.totalorder %s35, 0
        %s499 = scalar_select %p498, %s36, 1
        %s500 = smul.u32 4, %s499
        %p501 = scmp.lt.s32.totalorder %s500, 7
        %s502 = scalar_select %p501, %s500, 7
        %s503 = scalar_lea.vmem %s1, %s502
        %p504 = pneg %p98
        %p505 = pneg %p95
        %p506 = scmp.eq.s32.totalorder %s35, 0
        %s507 = scalar_select %p506, %s36, 1
        %s508 = smul.u32 64, %s507
        %p509 = scmp.lt.s32.totalorder %s508, 127
        %s510 = scalar_select %p509, %s508, 127
        %s511 = smul.addr %s510, 8
        %s512 = scalar_lea.vmem %s2, %s511
        %p513 = pneg %p128
        %p514 = pneg %p125
        %p515 = pneg %p149
        %p516 = pneg %p146
        %s517 = sand.u32 %s166, 1
        %s518 = scalar_lea.sflag [#allocation5], %s517
        %s519 = sand.u32 %s166, 1
        %s520 = smul.addr %s519, 512
        %s521 = scalar_lea.vmem [#allocation4], %s520
        %p522 = pneg %p179
        %p523 = pneg %p176
        %p524 = pneg %p200
        %p525 = pneg %p197
        %p526 = scmp.lt.s32.totalorder %s35, 0
        %s527 = scalar_select %p526, %s35, 0
        %s528 = smul.addr %s527, 4
        %s529 = scalar_lea.vmem %s6, %s528
        %p530 = pneg %p226
        %p531 = pneg %p223
        %p532 = pneg %p247
        %p533 = pneg %p244
        %p534 = pneg %p268
        %p535 = pneg %p265
        %p536 = pneg %p289
        %p537 = pneg %p286
        %p538 = pneg %p315
        %p539 = pneg %p312
        %p540 = pneg %p345
        %p541 = pneg %p342
        %s542 = sand.u32 %s31, 1
        %s543 = scalar_lea.sflag [#allocation6], %s542
        %s544 = sand.u32 %s332, 1
        %s545 = smul.addr %s544, 512
        %s546 = scalar_lea.vmem [#allocation15], %s545
        %p547 = pneg %p366
        %p548 = pneg %p363
        %p549 = scmp.eq.s32.totalorder %s35, 0
        %s550 = scalar_select %p549, %s36, 1
        %s551 = smul.u32 4, %s550
        %p552 = scmp.lt.s32.totalorder %s551, 7
        %s553 = scalar_select %p552, %s551, 7
        %s554 = scalar_lea.vmem %s0, %s553
        %p555 = scmp.eq.s32.totalorder %s35, 0
        %s556 = scalar_select %p555, %s36, 1
        %s557 = smul.u32 4, %s556
        %p558 = scmp.eq.s32.totalorder %s35, 0
        %s559 = scalar_select %p558, %s36, 1
        %s560 = smul.u32 4, %s559
        %p561 = scmp.lt.s32.totalorder %s560, 7
        %s562 = scalar_select %p561, %s560, 7
        %s563 = scalar_lea.vmem %s1, %s562
        %p564 = scmp.eq.s32.totalorder %s35, 0
        %s565 = scalar_select %p564, %s36, 1
        %s566 = smul.u32 4, %s565
        %p567 = scmp.eq.s32.totalorder %s35, 0
        %s568 = scalar_select %p567, %s36, 1
        %s569 = smul.u32 64, %s568
        %p570 = scmp.lt.s32.totalorder %s569, 127
        %s571 = scalar_select %p570, %s569, 127
        %s572 = smul.addr %s571, 8
        %s573 = scalar_lea.vmem %s2, %s572
        %p574 = scmp.eq.s32.totalorder %s35, 0
        %s575 = scalar_select %p574, %s36, 1
        %s576 = smul.u32 64, %s575
        %p577 = scmp.eq.s32.totalorder %s35, 0
        %s578 = scalar_select %p577, %s36, 1
        %s579 = smul.u32 64, %s578
        %p580 = scmp.lt.s32.totalorder %s35, 0
        %s581 = scalar_select %p580, %s35, 0
        %s582 = smul.addr %s581, 4
        %s583 = scalar_lea.vmem %s6, %s582
        %p584 = scmp.eq.s32.totalorder %s35, 0
        %s585 = scalar_select %p584, %s36, 1
        %s586 = smul.u32 64, %s585
        %p587 = scmp.eq.s32.totalorder %s35, 0
        %p588 = scmp.eq.s32.totalorder %s36, 0
        %p589 = pnand %p587, %p588
        %p590 = pneg %p589
        // Predicated region
        $region57: #{tpu_custom_call.1} parent=47 // pred_check
          _
        $region58: #{tpu_custom_call.1} parent=47 // pred_check_branch
          %592 = sbr.rel (%p589) target = $region60
        $region59: #{tpu_custom_call.1} parent=47 // pred_region
          %593 = vst [vmem:[#allocation2] sm:$0x3] 0.0
          %594 = vst [vmem:[#allocation3] sm:$0x3] 0.0
          %v595 = vld [vmem:[#allocation7] sm:$0x1]
          %v596 = vmul.f32 %v595, 0.2
          %v597 = vld [vmem:[%s3] sm:$0x1]
          %v598 = vmul.f32 %v597, 0.8
          %v599 = vadd.f32 %v596, %v598
          %600 = vst [vmem:[#allocation16] sm:$0x1] %v599
        $region60: #{tpu_custom_call.1} parent=47 // pred_fallthru
          _
        // Predicated region
        $region61: #{tpu_custom_call.1} parent=47 // pred_check
          %p601 = pneg %p587
        $region62: #{tpu_custom_call.1} parent=47 // pred_check_branch
          %603 = sbr.rel (%p601) target = $region64
        $region63: #{tpu_custom_call.1} parent=47 // pred_region
          %v604 = vld [vmem:[%s479] sm:$0xff]
          %v605 = vld [vmem:[%s479 + $0x8] sm:$0xff]
          %v606 = vld [vmem:[%s479 + $0x10] sm:$0xff]
          %v607 = vld [vmem:[%s479 + $0x18] sm:$0xff]
          %v608 = vld [vmem:[%s479 + $0x20] sm:$0xff]
          %v609 = vld [vmem:[%s479 + $0x28] sm:$0xff]
          %v610 = vld [vmem:[%s479 + $0x30] sm:$0xff]
          %v611 = vld [vmem:[%s479 + $0x38] sm:$0xff]
          %v612 = vld [vmem:[%s479 + $0x40] sm:$0xff]
          %v613 = vld [vmem:[%s479 + $0x48] sm:$0xff]
          %v614 = vld [vmem:[%s479 + $0x50] sm:$0xff]
          %v615 = vld [vmem:[%s479 + $0x58] sm:$0xff]
          %v616 = vld [vmem:[%s479 + $0x60] sm:$0xff]
          %v617 = vld [vmem:[%s479 + $0x68] sm:$0xff]
          %v618 = vld [vmem:[%s479 + $0x70] sm:$0xff]
          %v619 = vld [vmem:[%s479 + $0x78] sm:$0xff]
          %v620 = vld [vmem:[%s479 + $0x80] sm:$0xff]
          %v621 = vld [vmem:[%s479 + $0x88] sm:$0xff]
          %v622 = vld [vmem:[%s479 + $0x90] sm:$0xff]
          %v623 = vld [vmem:[%s479 + $0x98] sm:$0xff]
          %v624 = vld [vmem:[%s479 + $0xa0] sm:$0xff]
          %v625 = vld [vmem:[%s479 + $0xa8] sm:$0xff]
          %v626 = vld [vmem:[%s479 + $0xb0] sm:$0xff]
          %v627 = vld [vmem:[%s479 + $0xb8] sm:$0xff]
          %v628 = vld [vmem:[%s479 + $0xc0] sm:$0xff]
          %v629 = vld [vmem:[%s479 + $0xc8] sm:$0xff]
          %v630 = vld [vmem:[%s479 + $0xd0] sm:$0xff]
          %v631 = vld [vmem:[%s479 + $0xd8] sm:$0xff]
          %v632 = vld [vmem:[%s479 + $0xe0] sm:$0xff]
          %v633 = vld [vmem:[%s479 + $0xe8] sm:$0xff]
          %v634 = vld [vmem:[%s479 + $0xf0] sm:$0xff]
          %v635 = vld [vmem:[%s479 + $0xf8] sm:$0xff]
          %v636 = vld [vmem:[%s479 + $0x100] sm:$0xff]
          %v637 = vld [vmem:[%s479 + $0x108] sm:$0xff]
          %v638 = vld [vmem:[%s479 + $0x110] sm:$0xff]
          %v639 = vld [vmem:[%s479 + $0x118] sm:$0xff]
          %v640 = vld [vmem:[%s479 + $0x120] sm:$0xff]
          %v641 = vld [vmem:[%s479 + $0x128] sm:$0xff]
          %v642 = vld [vmem:[%s479 + $0x130] sm:$0xff]
          %v643 = vld [vmem:[%s479 + $0x138] sm:$0xff]
          %v644 = vld [vmem:[%s479 + $0x140] sm:$0xff]
          %v645 = vld [vmem:[%s479 + $0x148] sm:$0xff]
          %v646 = vld [vmem:[%s479 + $0x150] sm:$0xff]
          %v647 = vld [vmem:[%s479 + $0x158] sm:$0xff]
          %v648 = vld [vmem:[%s479 + $0x160] sm:$0xff]
          %v649 = vld [vmem:[%s479 + $0x168] sm:$0xff]
          %v650 = vld [vmem:[%s479 + $0x170] sm:$0xff]
          %v651 = vld [vmem:[%s479 + $0x178] sm:$0xff]
          %v652 = vld [vmem:[%s479 + $0x180] sm:$0xff]
          %v653 = vld [vmem:[%s479 + $0x188] sm:$0xff]
          %v654 = vld [vmem:[%s479 + $0x190] sm:$0xff]
          %v655 = vld [vmem:[%s479 + $0x198] sm:$0xff]
          %v656 = vld [vmem:[%s479 + $0x1a0] sm:$0xff]
          %v657 = vld [vmem:[%s479 + $0x1a8] sm:$0xff]
          %v658 = vld [vmem:[%s479 + $0x1b0] sm:$0xff]
          %v659 = vld [vmem:[%s479 + $0x1b8] sm:$0xff]
          %v660 = vld [vmem:[%s479 + $0x1c0] sm:$0xff]
          %v661 = vld [vmem:[%s479 + $0x1c8] sm:$0xff]
          %v662 = vld [vmem:[%s479 + $0x1d0] sm:$0xff]
          %v663 = vld [vmem:[%s479 + $0x1d8] sm:$0xff]
          %v664 = vld [vmem:[%s479 + $0x1e0] sm:$0xff]
          %v665 = vld [vmem:[%s479 + $0x1e8] sm:$0xff]
          %v666 = vld [vmem:[%s479 + $0x1f0] sm:$0xff]
          %v667 = vld [vmem:[%s479 + $0x1f8] sm:$0xff]
          %v668 = vmul.f32 %v604, 0.2
          %v669 = vmul.f32 %v605, 0.2
          %v670 = vmul.f32 %v606, 0.2
          %v671 = vmul.f32 %v607, 0.2
          %v672 = vmul.f32 %v608, 0.2
          %v673 = vmul.f32 %v609, 0.2
          %v674 = vmul.f32 %v610, 0.2
          %v675 = vmul.f32 %v611, 0.2
          %v676 = vmul.f32 %v612, 0.2
          %v677 = vmul.f32 %v613, 0.2
          %v678 = vmul.f32 %v614, 0.2
          %v679 = vmul.f32 %v615, 0.2
          %v680 = vmul.f32 %v616, 0.2
          %v681 = vmul.f32 %v617, 0.2
          %v682 = vmul.f32 %v618, 0.2
          %v683 = vmul.f32 %v619, 0.2
          %v684 = vmul.f32 %v620, 0.2
          %v685 = vmul.f32 %v621, 0.2
          %v686 = vmul.f32 %v622, 0.2
          %v687 = vmul.f32 %v623, 0.2
          %v688 = vmul.f32 %v624, 0.2
          %v689 = vmul.f32 %v625, 0.2
          %v690 = vmul.f32 %v626, 0.2
          %v691 = vmul.f32 %v627, 0.2
          %v692 = vmul.f32 %v628, 0.2
          %v693 = vmul.f32 %v629, 0.2
          %v694 = vmul.f32 %v630, 0.2
          %v695 = vmul.f32 %v631, 0.2
          %v696 = vmul.f32 %v632, 0.2
          %v697 = vmul.f32 %v633, 0.2
          %v698 = vmul.f32 %v634, 0.2
          %v699 = vmul.f32 %v635, 0.2
          %v700 = vmul.f32 %v636, 0.2
          %v701 = vmul.f32 %v637, 0.2
          %v702 = vmul.f32 %v638, 0.2
          %v703 = vmul.f32 %v639, 0.2
          %v704 = vmul.f32 %v640, 0.2
          %v705 = vmul.f32 %v641, 0.2
          %v706 = vmul.f32 %v642, 0.2
          %v707 = vmul.f32 %v643, 0.2
          %v708 = vmul.f32 %v644, 0.2
          %v709 = vmul.f32 %v645, 0.2
          %v710 = vmul.f32 %v646, 0.2
          %v711 = vmul.f32 %v647, 0.2
          %v712 = vmul.f32 %v648, 0.2
          %v713 = vmul.f32 %v649, 0.2
          %v714 = vmul.f32 %v650, 0.2
          %v715 = vmul.f32 %v651, 0.2
          %v716 = vmul.f32 %v652, 0.2
          %v717 = vmul.f32 %v653, 0.2
          %v718 = vmul.f32 %v654, 0.2
          %v719 = vmul.f32 %v655, 0.2
          %v720 = vmul.f32 %v656, 0.2
          %v721 = vmul.f32 %v657, 0.2
          %v722 = vmul.f32 %v658, 0.2
          %v723 = vmul.f32 %v659, 0.2
          %v724 = vmul.f32 %v660, 0.2
          %v725 = vmul.f32 %v661, 0.2
          %v726 = vmul.f32 %v662, 0.2
          %v727 = vmul.f32 %v663, 0.2
          %v728 = vmul.f32 %v664, 0.2
          %v729 = vmul.f32 %v665, 0.2
          %v730 = vmul.f32 %v666, 0.2
          %v731 = vmul.f32 %v667, 0.2
          %v732 = vld [vmem:[%s573] sm:$0xff]
          %v733 = vld [vmem:[%s573 + $0x8] sm:$0xff]
          %v734 = vld [vmem:[%s573 + $0x10] sm:$0xff]
          %v735 = vld [vmem:[%s573 + $0x18] sm:$0xff]
          %v736 = vld [vmem:[%s573 + $0x20] sm:$0xff]
          %v737 = vld [vmem:[%s573 + $0x28] sm:$0xff]
          %v738 = vld [vmem:[%s573 + $0x30] sm:$0xff]
          %v739 = vld [vmem:[%s573 + $0x38] sm:$0xff]
          %v740 = vld [vmem:[%s573 + $0x40] sm:$0xff]
          %v741 = vld [vmem:[%s573 + $0x48] sm:$0xff]
          %v742 = vld [vmem:[%s573 + $0x50] sm:$0xff]
          %v743 = vld [vmem:[%s573 + $0x58] sm:$0xff]
          %v744 = vld [vmem:[%s573 + $0x60] sm:$0xff]
          %v745 = vld [vmem:[%s573 + $0x68] sm:$0xff]
          %v746 = vld [vmem:[%s573 + $0x70] sm:$0xff]
          %v747 = vld [vmem:[%s573 + $0x78] sm:$0xff]
          %v748 = vld [vmem:[%s573 + $0x80] sm:$0xff]
          %v749 = vld [vmem:[%s573 + $0x88] sm:$0xff]
          %v750 = vld [vmem:[%s573 + $0x90] sm:$0xff]
          %v751 = vld [vmem:[%s573 + $0x98] sm:$0xff]
          %v752 = vld [vmem:[%s573 + $0xa0] sm:$0xff]
          %v753 = vld [vmem:[%s573 + $0xa8] sm:$0xff]
          %v754 = vld [vmem:[%s573 + $0xb0] sm:$0xff]
          %v755 = vld [vmem:[%s573 + $0xb8] sm:$0xff]
          %v756 = vld [vmem:[%s573 + $0xc0] sm:$0xff]
          %v757 = vld [vmem:[%s573 + $0xc8] sm:$0xff]
          %v758 = vld [vmem:[%s573 + $0xd0] sm:$0xff]
          %v759 = vld [vmem:[%s573 + $0xd8] sm:$0xff]
          %v760 = vld [vmem:[%s573 + $0xe0] sm:$0xff]
          %v761 = vld [vmem:[%s573 + $0xe8] sm:$0xff]
          %v762 = vld [vmem:[%s573 + $0xf0] sm:$0xff]
          %v763 = vld [vmem:[%s573 + $0xf8] sm:$0xff]
          %v764 = vld [vmem:[%s573 + $0x100] sm:$0xff]
          %v765 = vld [vmem:[%s573 + $0x108] sm:$0xff]
          %v766 = vld [vmem:[%s573 + $0x110] sm:$0xff]
          %v767 = vld [vmem:[%s573 + $0x118] sm:$0xff]
          %v768 = vld [vmem:[%s573 + $0x120] sm:$0xff]
          %v769 = vld [vmem:[%s573 + $0x128] sm:$0xff]
          %v770 = vld [vmem:[%s573 + $0x130] sm:$0xff]
          %v771 = vld [vmem:[%s573 + $0x138] sm:$0xff]
          %v772 = vld [vmem:[%s573 + $0x140] sm:$0xff]
          %v773 = vld [vmem:[%s573 + $0x148] sm:$0xff]
          %v774 = vld [vmem:[%s573 + $0x150] sm:$0xff]
          %v775 = vld [vmem:[%s573 + $0x158] sm:$0xff]
          %v776 = vld [vmem:[%s573 + $0x160] sm:$0xff]
          %v777 = vld [vmem:[%s573 + $0x168] sm:$0xff]
          %v778 = vld [vmem:[%s573 + $0x170] sm:$0xff]
          %v779 = vld [vmem:[%s573 + $0x178] sm:$0xff]
          %v780 = vld [vmem:[%s573 + $0x180] sm:$0xff]
          %v781 = vld [vmem:[%s573 + $0x188] sm:$0xff]
          %v782 = vld [vmem:[%s573 + $0x190] sm:$0xff]
          %v783 = vld [vmem:[%s573 + $0x198] sm:$0xff]
          %v784 = vld [vmem:[%s573 + $0x1a0] sm:$0xff]
          %v785 = vld [vmem:[%s573 + $0x1a8] sm:$0xff]
          %v786 = vld [vmem:[%s573 + $0x1b0] sm:$0xff]
          %v787 = vld [vmem:[%s573 + $0x1b8] sm:$0xff]
          %v788 = vld [vmem:[%s573 + $0x1c0] sm:$0xff]
          %v789 = vld [vmem:[%s573 + $0x1c8] sm:$0xff]
          %v790 = vld [vmem:[%s573 + $0x1d0] sm:$0xff]
          %v791 = vld [vmem:[%s573 + $0x1d8] sm:$0xff]
          %v792 = vld [vmem:[%s573 + $0x1e0] sm:$0xff]
          %v793 = vld [vmem:[%s573 + $0x1e8] sm:$0xff]
          %v794 = vld [vmem:[%s573 + $0x1f0] sm:$0xff]
          %v795 = vld [vmem:[%s573 + $0x1f8] sm:$0xff]
          %v796 = vmul.f32 %v732, 0.8
          %v797 = vmul.f32 %v733, 0.8
          %v798 = vmul.f32 %v734, 0.8
          %v799 = vmul.f32 %v735, 0.8
          %v800 = vmul.f32 %v736, 0.8
          %v801 = vmul.f32 %v737, 0.8
          %v802 = vmul.f32 %v738, 0.8
          %v803 = vmul.f32 %v739, 0.8
          %v804 = vmul.f32 %v740, 0.8
          %v805 = vmul.f32 %v741, 0.8
          %v806 = vmul.f32 %v742, 0.8
          %v807 = vmul.f32 %v743, 0.8
          %v808 = vmul.f32 %v744, 0.8
          %v809 = vmul.f32 %v745, 0.8
          %v810 = vmul.f32 %v746, 0.8
          %v811 = vmul.f32 %v747, 0.8
          %v812 = vmul.f32 %v748, 0.8
          %v813 = vmul.f32 %v749, 0.8
          %v814 = vmul.f32 %v750, 0.8
          %v815 = vmul.f32 %v751, 0.8
          %v816 = vmul.f32 %v752, 0.8
          %v817 = vmul.f32 %v753, 0.8
          %v818 = vmul.f32 %v754, 0.8
          %v819 = vmul.f32 %v755, 0.8
          %v820 = vmul.f32 %v756, 0.8
          %v821 = vmul.f32 %v757, 0.8
          %v822 = vmul.f32 %v758, 0.8
          %v823 = vmul.f32 %v759, 0.8
          %v824 = vmul.f32 %v760, 0.8
          %v825 = vmul.f32 %v761, 0.8
          %v826 = vmul.f32 %v762, 0.8
          %v827 = vmul.f32 %v763, 0.8
          %v828 = vmul.f32 %v764, 0.8
          %v829 = vmul.f32 %v765, 0.8
          %v830 = vmul.f32 %v766, 0.8
          %v831 = vmul.f32 %v767, 0.8
          %v832 = vmul.f32 %v768, 0.8
          %v833 = vmul.f32 %v769, 0.8
          %v834 = vmul.f32 %v770, 0.8
          %v835 = vmul.f32 %v771, 0.8
          %v836 = vmul.f32 %v772, 0.8
          %v837 = vmul.f32 %v773, 0.8
          %v838 = vmul.f32 %v774, 0.8
          %v839 = vmul.f32 %v775, 0.8
          %v840 = vmul.f32 %v776, 0.8
          %v841 = vmul.f32 %v777, 0.8
          %v842 = vmul.f32 %v778, 0.8
          %v843 = vmul.f32 %v779, 0.8
          %v844 = vmul.f32 %v780, 0.8
          %v845 = vmul.f32 %v781, 0.8
          %v846 = vmul.f32 %v782, 0.8
          %v847 = vmul.f32 %v783, 0.8
          %v848 = vmul.f32 %v784, 0.8
          %v849 = vmul.f32 %v785, 0.8
          %v850 = vmul.f32 %v786, 0.8
          %v851 = vmul.f32 %v787, 0.8
          %v852 = vmul.f32 %v788, 0.8
          %v853 = vmul.f32 %v789, 0.8
          %v854 = vmul.f32 %v790, 0.8
          %v855 = vmul.f32 %v791, 0.8
          %v856 = vmul.f32 %v792, 0.8
          %v857 = vmul.f32 %v793, 0.8
          %v858 = vmul.f32 %v794, 0.8
          %v859 = vmul.f32 %v795, 0.8
          %v860 = vadd.f32 %v668, %v796
          %v861 = vadd.f32 %v669, %v797
          %v862 = vadd.f32 %v670, %v798
          %v863 = vadd.f32 %v671, %v799
          %v864 = vadd.f32 %v672, %v800
          %v865 = vadd.f32 %v673, %v801
          %v866 = vadd.f32 %v674, %v802
          %v867 = vadd.f32 %v675, %v803
          %v868 = vadd.f32 %v676, %v804
          %v869 = vadd.f32 %v677, %v805
          %v870 = vadd.f32 %v678, %v806
          %v871 = vadd.f32 %v679, %v807
          %v872 = vadd.f32 %v680, %v808
          %v873 = vadd.f32 %v681, %v809
          %v874 = vadd.f32 %v682, %v810
          %v875 = vadd.f32 %v683, %v811
          %v876 = vadd.f32 %v684, %v812
          %v877 = vadd.f32 %v685, %v813
          %v878 = vadd.f32 %v686, %v814
          %v879 = vadd.f32 %v687, %v815
          %v880 = vadd.f32 %v688, %v816
          %v881 = vadd.f32 %v689, %v817
          %v882 = vadd.f32 %v690, %v818
          %v883 = vadd.f32 %v691, %v819
          %v884 = vadd.f32 %v692, %v820
          %v885 = vadd.f32 %v693, %v821
          %v886 = vadd.f32 %v694, %v822
          %v887 = vadd.f32 %v695, %v823
          %v888 = vadd.f32 %v696, %v824
          %v889 = vadd.f32 %v697, %v825
          %v890 = vadd.f32 %v698, %v826
          %v891 = vadd.f32 %v699, %v827
          %v892 = vadd.f32 %v700, %v828
          %v893 = vadd.f32 %v701, %v829
          %v894 = vadd.f32 %v702, %v830
          %v895 = vadd.f32 %v703, %v831
          %v896 = vadd.f32 %v704, %v832
          %v897 = vadd.f32 %v705, %v833
          %v898 = vadd.f32 %v706, %v834
          %v899 = vadd.f32 %v707, %v835
          %v900 = vadd.f32 %v708, %v836
          %v901 = vadd.f32 %v709, %v837
          %v902 = vadd.f32 %v710, %v838
          %v903 = vadd.f32 %v711, %v839
          %v904 = vadd.f32 %v712, %v840
          %v905 = vadd.f32 %v713, %v841
          %v906 = vadd.f32 %v714, %v842
          %v907 = vadd.f32 %v715, %v843
          %v908 = vadd.f32 %v716, %v844
          %v909 = vadd.f32 %v717, %v845
          %v910 = vadd.f32 %v718, %v846
          %v911 = vadd.f32 %v719, %v847
          %v912 = vadd.f32 %v720, %v848
          %v913 = vadd.f32 %v721, %v849
          %v914 = vadd.f32 %v722, %v850
          %v915 = vadd.f32 %v723, %v851
          %v916 = vadd.f32 %v724, %v852
          %v917 = vadd.f32 %v725, %v853
          %v918 = vadd.f32 %v726, %v854
          %v919 = vadd.f32 %v727, %v855
          %v920 = vadd.f32 %v728, %v856
          %v921 = vadd.f32 %v729, %v857
          %v922 = vadd.f32 %v730, %v858
          %v923 = vadd.f32 %v731, %v859
          %924 = vst [vmem:[%s546] sm:$0xff] %v860
          %925 = vst [vmem:[%s546 + $0x8] sm:$0xff] %v861
          %926 = vst [vmem:[%s546 + $0x10] sm:$0xff] %v862
          %927 = vst [vmem:[%s546 + $0x18] sm:$0xff] %v863
          %928 = vst [vmem:[%s546 + $0x20] sm:$0xff] %v864
          %929 = vst [vmem:[%s546 + $0x28] sm:$0xff] %v865
          %930 = vst [vmem:[%s546 + $0x30] sm:$0xff] %v866
          %931 = vst [vmem:[%s546 + $0x38] sm:$0xff] %v867
          %932 = vst [vmem:[%s546 + $0x40] sm:$0xff] %v868
          %933 = vst [vmem:[%s546 + $0x48] sm:$0xff] %v869
          %934 = vst [vmem:[%s546 + $0x50] sm:$0xff] %v870
          %935 = vst [vmem:[%s546 + $0x58] sm:$0xff] %v871
          %936 = vst [vmem:[%s546 + $0x60] sm:$0xff] %v872
          %937 = vst [vmem:[%s546 + $0x68] sm:$0xff] %v873
          %938 = vst [vmem:[%s546 + $0x70] sm:$0xff] %v874
          %939 = vst [vmem:[%s546 + $0x78] sm:$0xff] %v875
          %940 = vst [vmem:[%s546 + $0x80] sm:$0xff] %v876
          %941 = vst [vmem:[%s546 + $0x88] sm:$0xff] %v877
          %942 = vst [vmem:[%s546 + $0x90] sm:$0xff] %v878
          %943 = vst [vmem:[%s546 + $0x98] sm:$0xff] %v879
          %944 = vst [vmem:[%s546 + $0xa0] sm:$0xff] %v880
          %945 = vst [vmem:[%s546 + $0xa8] sm:$0xff] %v881
          %946 = vst [vmem:[%s546 + $0xb0] sm:$0xff] %v882
          %947 = vst [vmem:[%s546 + $0xb8] sm:$0xff] %v883
          %948 = vst [vmem:[%s546 + $0xc0] sm:$0xff] %v884
          %949 = vst [vmem:[%s546 + $0xc8] sm:$0xff] %v885
          %950 = vst [vmem:[%s546 + $0xd0] sm:$0xff] %v886
          %951 = vst [vmem:[%s546 + $0xd8] sm:$0xff] %v887
          %952 = vst [vmem:[%s546 + $0xe0] sm:$0xff] %v888
          %953 = vst [vmem:[%s546 + $0xe8] sm:$0xff] %v889
          %954 = vst [vmem:[%s546 + $0xf0] sm:$0xff] %v890
          %955 = vst [vmem:[%s546 + $0xf8] sm:$0xff] %v891
          %956 = vst [vmem:[%s546 + $0x100] sm:$0xff] %v892
          %957 = vst [vmem:[%s546 + $0x108] sm:$0xff] %v893
          %958 = vst [vmem:[%s546 + $0x110] sm:$0xff] %v894
          %959 = vst [vmem:[%s546 + $0x118] sm:$0xff] %v895
          %960 = vst [vmem:[%s546 + $0x120] sm:$0xff] %v896
          %961 = vst [vmem:[%s546 + $0x128] sm:$0xff] %v897
          %962 = vst [vmem:[%s546 + $0x130] sm:$0xff] %v898
          %963 = vst [vmem:[%s546 + $0x138] sm:$0xff] %v899
          %964 = vst [vmem:[%s546 + $0x140] sm:$0xff] %v900
          %965 = vst [vmem:[%s546 + $0x148] sm:$0xff] %v901
          %966 = vst [vmem:[%s546 + $0x150] sm:$0xff] %v902
          %967 = vst [vmem:[%s546 + $0x158] sm:$0xff] %v903
          %968 = vst [vmem:[%s546 + $0x160] sm:$0xff] %v904
          %969 = vst [vmem:[%s546 + $0x168] sm:$0xff] %v905
          %970 = vst [vmem:[%s546 + $0x170] sm:$0xff] %v906
          %971 = vst [vmem:[%s546 + $0x178] sm:$0xff] %v907
          %972 = vst [vmem:[%s546 + $0x180] sm:$0xff] %v908
          %973 = vst [vmem:[%s546 + $0x188] sm:$0xff] %v909
          %974 = vst [vmem:[%s546 + $0x190] sm:$0xff] %v910
          %975 = vst [vmem:[%s546 + $0x198] sm:$0xff] %v911
          %976 = vst [vmem:[%s546 + $0x1a0] sm:$0xff] %v912
          %977 = vst [vmem:[%s546 + $0x1a8] sm:$0xff] %v913
          %978 = vst [vmem:[%s546 + $0x1b0] sm:$0xff] %v914
          %979 = vst [vmem:[%s546 + $0x1b8] sm:$0xff] %v915
          %980 = vst [vmem:[%s546 + $0x1c0] sm:$0xff] %v916
          %981 = vst [vmem:[%s546 + $0x1c8] sm:$0xff] %v917
          %982 = vst [vmem:[%s546 + $0x1d0] sm:$0xff] %v918
          %983 = vst [vmem:[%s546 + $0x1d8] sm:$0xff] %v919
          %984 = vst [vmem:[%s546 + $0x1e0] sm:$0xff] %v920
          %985 = vst [vmem:[%s546 + $0x1e8] sm:$0xff] %v921
          %986 = vst [vmem:[%s546 + $0x1f0] sm:$0xff] %v922
          %987 = vst [vmem:[%s546 + $0x1f8] sm:$0xff] %v923
          %v988 = vld [vmem:[#allocation2] sm:$0x3]
          %v989 = vld [vmem:[%s554] sm:$0xf]
          %v990 = vld [vmem:[%s573] sm:$0xff]
          %v991 = vld [vmem:[%s573 + $0x8] sm:$0xff]
          %v992 = vld [vmem:[%s573 + $0x10] sm:$0xff]
          %v993 = vld [vmem:[%s573 + $0x18] sm:$0xff]
          %v994 = vld [vmem:[%s573 + $0x20] sm:$0xff]
          %v995 = vld [vmem:[%s573 + $0x28] sm:$0xff]
          %v996 = vld [vmem:[%s573 + $0x30] sm:$0xff]
          %v997 = vld [vmem:[%s573 + $0x38] sm:$0xff]
          %v998 = vld [vmem:[%s573 + $0x40] sm:$0xff]
          %v999 = vld [vmem:[%s573 + $0x48] sm:$0xff]
          %v1000 = vld [vmem:[%s573 + $0x50] sm:$0xff]
          %v1001 = vld [vmem:[%s573 + $0x58] sm:$0xff]
          %v1002 = vld [vmem:[%s573 + $0x60] sm:$0xff]
          %v1003 = vld [vmem:[%s573 + $0x68] sm:$0xff]
          %v1004 = vld [vmem:[%s573 + $0x70] sm:$0xff]
          %v1005 = vld [vmem:[%s573 + $0x78] sm:$0xff]
          %v1006 = vld [vmem:[%s573 + $0x80] sm:$0xff]
          %v1007 = vld [vmem:[%s573 + $0x88] sm:$0xff]
          %v1008 = vld [vmem:[%s573 + $0x90] sm:$0xff]
          %v1009 = vld [vmem:[%s573 + $0x98] sm:$0xff]
          %v1010 = vld [vmem:[%s573 + $0xa0] sm:$0xff]
          %v1011 = vld [vmem:[%s573 + $0xa8] sm:$0xff]
          %v1012 = vld [vmem:[%s573 + $0xb0] sm:$0xff]
          %v1013 = vld [vmem:[%s573 + $0xb8] sm:$0xff]
          %v1014 = vld [vmem:[%s573 + $0xc0] sm:$0xff]
          %v1015 = vld [vmem:[%s573 + $0xc8] sm:$0xff]
          %v1016 = vld [vmem:[%s573 + $0xd0] sm:$0xff]
          %v1017 = vld [vmem:[%s573 + $0xd8] sm:$0xff]
          %v1018 = vld [vmem:[%s573 + $0xe0] sm:$0xff]
          %v1019 = vld [vmem:[%s573 + $0xe8] sm:$0xff]
          %v1020 = vld [vmem:[%s573 + $0xf0] sm:$0xff]
          %v1021 = vld [vmem:[%s573 + $0xf8] sm:$0xff]
          %v1022 = vld [vmem:[%s573 + $0x100] sm:$0xff]
          %v1023 = vld [vmem:[%s573 + $0x108] sm:$0xff]
          %v1024 = vld [vmem:[%s573 + $0x110] sm:$0xff]
          %v1025 = vld [vmem:[%s573 + $0x118] sm:$0xff]
          %v1026 = vld [vmem:[%s573 + $0x120] sm:$0xff]
          %v1027 = vld [vmem:[%s573 + $0x128] sm:$0xff]
          %v1028 = vld [vmem:[%s573 + $0x130] sm:$0xff]
          %v1029 = vld [vmem:[%s573 + $0x138] sm:$0xff]
          %v1030 = vld [vmem:[%s573 + $0x140] sm:$0xff]
          %v1031 = vld [vmem:[%s573 + $0x148] sm:$0xff]
          %v1032 = vld [vmem:[%s573 + $0x150] sm:$0xff]
          %v1033 = vld [vmem:[%s573 + $0x158] sm:$0xff]
          %v1034 = vld [vmem:[%s573 + $0x160] sm:$0xff]
          %v1035 = vld [vmem:[%s573 + $0x168] sm:$0xff]
          %v1036 = vld [vmem:[%s573 + $0x170] sm:$0xff]
          %v1037 = vld [vmem:[%s573 + $0x178] sm:$0xff]
          %v1038 = vld [vmem:[%s573 + $0x180] sm:$0xff]
          %v1039 = vld [vmem:[%s573 + $0x188] sm:$0xff]
          %v1040 = vld [vmem:[%s573 + $0x190] sm:$0xff]
          %v1041 = vld [vmem:[%s573 + $0x198] sm:$0xff]
          %v1042 = vld [vmem:[%s573 + $0x1a0] sm:$0xff]
          %v1043 = vld [vmem:[%s573 + $0x1a8] sm:$0xff]
          %v1044 = vld [vmem:[%s573 + $0x1b0] sm:$0xff]
          %v1045 = vld [vmem:[%s573 + $0x1b8] sm:$0xff]
          %v1046 = vld [vmem:[%s573 + $0x1c0] sm:$0xff]
          %v1047 = vld [vmem:[%s573 + $0x1c8] sm:$0xff]
          %v1048 = vld [vmem:[%s573 + $0x1d0] sm:$0xff]
          %v1049 = vld [vmem:[%s573 + $0x1d8] sm:$0xff]
          %v1050 = vld [vmem:[%s573 + $0x1e0] sm:$0xff]
          %v1051 = vld [vmem:[%s573 + $0x1e8] sm:$0xff]
          %v1052 = vld [vmem:[%s573 + $0x1f0] sm:$0xff]
          %v1053 = vld [vmem:[%s573 + $0x1f8] sm:$0xff]
          %v1054 = vpack.c.bf16 %v991, %v990
          %v1055 = vpack.c.bf16 %v993, %v992
          %v1056 = vpack.c.bf16 %v995, %v994
          %v1057 = vpack.c.bf16 %v997, %v996
          %v1058 = vpack.c.bf16 %v999, %v998
          %v1059 = vpack.c.bf16 %v1001, %v1000
          %v1060 = vpack.c.bf16 %v1003, %v1002
          %v1061 = vpack.c.bf16 %v1005, %v1004
          %v1062 = vpack.c.bf16 %v1007, %v1006
          %v1063 = vpack.c.bf16 %v1009, %v1008
          %v1064 = vpack.c.bf16 %v1011, %v1010
          %v1065 = vpack.c.bf16 %v1013, %v1012
          %v1066 = vpack.c.bf16 %v1015, %v1014
          %v1067 = vpack.c.bf16 %v1017, %v1016
          %v1068 = vpack.c.bf16 %v1019, %v1018
          %v1069 = vpack.c.bf16 %v1021, %v1020
          %v1070 = vpack.c.bf16 %v1023, %v1022
          %v1071 = vpack.c.bf16 %v1025, %v1024
          %v1072 = vpack.c.bf16 %v1027, %v1026
          %v1073 = vpack.c.bf16 %v1029, %v1028
          %v1074 = vpack.c.bf16 %v1031, %v1030
          %v1075 = vpack.c.bf16 %v1033, %v1032
          %v1076 = vpack.c.bf16 %v1035, %v1034
          %v1077 = vpack.c.bf16 %v1037, %v1036
          %v1078 = vpack.c.bf16 %v1039, %v1038
          %v1079 = vpack.c.bf16 %v1041, %v1040
          %v1080 = vpack.c.bf16 %v1043, %v1042
          %v1081 = vpack.c.bf16 %v1045, %v1044
          %v1082 = vpack.c.bf16 %v1047, %v1046
          %v1083 = vpack.c.bf16 %v1049, %v1048
          %v1084 = vpack.c.bf16 %v1051, %v1050
          %v1085 = vpack.c.bf16 %v1053, %v1052
          %1087 = vst [vmem:[#allocation1] ss:$9 sm:$0xff] %v989
          %v1088 = vld [vmem:[#allocation1] sm:$0xff]
          %v1089 = vld [vmem:[#allocation1 + $0x9] sm:$0xff]
          %v1090 = vld [vmem:[#allocation1 + $0x12] sm:$0xff]
          %v1091 = vld [vmem:[#allocation1 + $0x1b] sm:$0xff]
          %1096 = vmatpush.bf16.msra.mxu0 %v1061
          %1097 = vmatpush.bf16.msra.mxu0 %v1060
          %1098 = vmatpush.bf16.msra.mxu0 %v1059
          %1099 = vmatpush.bf16.msra.mxu0 %v1058
          %1100 = vmatpush.bf16.msra.mxu0 %v1057
          %1101 = vmatpush.bf16.msra.mxu0 %v1056
          %1102 = vmatpush.bf16.msra.mxu0 %v1055
          %1103 = vmatpush.bf16.msra.mxu0 %v1054
          %1104 = vmatmul.bf16.gmra.mxu0 %v1088
          %v1105 = vpop.f32.mrf.mxu0
          %v1106 = vadd.f32 0.0, %v1105
          %v1107 = vpop.f32.mrf.mxu0
          %1108 = vdwg.mxu0
          %1109 = vmatpush.bf16.msra.mxu0 %v1069
          %1110 = vmatpush.bf16.msra.mxu0 %v1068
          %1111 = vmatpush.bf16.msra.mxu0 %v1067
          %1112 = vmatpush.bf16.msra.mxu0 %v1066
          %1113 = vmatpush.bf16.msra.mxu0 %v1065
          %1114 = vmatpush.bf16.msra.mxu0 %v1064
          %1115 = vmatpush.bf16.msra.mxu0 %v1063
          %1116 = vmatpush.bf16.msra.mxu0 %v1062
          %1117 = vmatmul.bf16.gmra.mxu0 %v1089
          %v1118 = vpop.f32.mrf.mxu0
          %v1119 = vadd.f32 %v1106, %v1118
          %v1120 = vpop.f32.mrf.mxu0
          %1121 = vdwg.mxu0
          %1122 = vmatpush.bf16.msra.mxu0 %v1077
          %1123 = vmatpush.bf16.msra.mxu0 %v1076
          %1124 = vmatpush.bf16.msra.mxu0 %v1075
          %1125 = vmatpush.bf16.msra.mxu0 %v1074
          %1126 = vmatpush.bf16.msra.mxu0 %v1073
          %1127 = vmatpush.bf16.msra.mxu0 %v1072
          %1128 = vmatpush.bf16.msra.mxu0 %v1071
          %1129 = vmatpush.bf16.msra.mxu0 %v1070
          %1130 = vmatmul.bf16.gmra.mxu0 %v1090
          %v1131 = vpop.f32.mrf.mxu0
          %v1132 = vadd.f32 %v1119, %v1131
          %v1133 = vpop.f32.mrf.mxu0
          %1134 = vdwg.mxu0
          %1135 = vmatpush.bf16.msra.mxu0 %v1085
          %1136 = vmatpush.bf16.msra.mxu0 %v1084
          %1137 = vmatpush.bf16.msra.mxu0 %v1083
          %1138 = vmatpush.bf16.msra.mxu0 %v1082
          %1139 = vmatpush.bf16.msra.mxu0 %v1081
          %1140 = vmatpush.bf16.msra.mxu0 %v1080
          %1141 = vmatpush.bf16.msra.mxu0 %v1079
          %1142 = vmatpush.bf16.msra.mxu0 %v1078
          %1143 = vmatmul.bf16.gmra.mxu0 %v1091
          %v1144 = vpop.f32.mrf.mxu0
          %v1145 = vadd.f32 %v1132, %v1144
          %v1146 = vpop.f32.mrf.mxu0
          %1147 = vdwg.mxu0
          %v1148 = vadd.f32 %v988, %v1145
          %1149 = vst [vmem:[#allocation2] sm:$0x3] %v1148
          %v1150 = vld [vmem:[#allocation3] sm:$0x3]
          %v1151 = vld [vmem:[%s563] sm:$0xf]
          %v1152 = vpack.c.bf16 %v861, %v860
          %v1153 = vpack.c.bf16 %v863, %v862
          %v1154 = vpack.c.bf16 %v865, %v864
          %v1155 = vpack.c.bf16 %v867, %v866
          %v1156 = vpack.c.bf16 %v869, %v868
          %v1157 = vpack.c.bf16 %v871, %v870
          %v1158 = vpack.c.bf16 %v873, %v872
          %v1159 = vpack.c.bf16 %v875, %v874
          %v1160 = vpack.c.bf16 %v877, %v876
          %v1161 = vpack.c.bf16 %v879, %v878
          %v1162 = vpack.c.bf16 %v881, %v880
          %v1163 = vpack.c.bf16 %v883, %v882
          %v1164 = vpack.c.bf16 %v885, %v884
          %v1165 = vpack.c.bf16 %v887, %v886
          %v1166 = vpack.c.bf16 %v889, %v888
          %v1167 = vpack.c.bf16 %v891, %v890
          %v1168 = vpack.c.bf16 %v893, %v892
          %v1169 = vpack.c.bf16 %v895, %v894
          %v1170 = vpack.c.bf16 %v897, %v896
          %v1171 = vpack.c.bf16 %v899, %v898
          %v1172 = vpack.c.bf16 %v901, %v900
          %v1173 = vpack.c.bf16 %v903, %v902
          %v1174 = vpack.c.bf16 %v905, %v904
          %v1175 = vpack.c.bf16 %v907, %v906
          %v1176 = vpack.c.bf16 %v909, %v908
          %v1177 = vpack.c.bf16 %v911, %v910
          %v1178 = vpack.c.bf16 %v913, %v912
          %v1179 = vpack.c.bf16 %v915, %v914
          %v1180 = vpack.c.bf16 %v917, %v916
          %v1181 = vpack.c.bf16 %v919, %v918
          %v1182 = vpack.c.bf16 %v921, %v920
          %v1183 = vpack.c.bf16 %v923, %v922
          %1185 = vst [vmem:[#allocation1] ss:$9 sm:$0xff] %v1151
          %v1186 = vld [vmem:[#allocation1] sm:$0xff]
          %v1187 = vld [vmem:[#allocation1 + $0x9] sm:$0xff]
          %v1188 = vld [vmem:[#allocation1 + $0x12] sm:$0xff]
          %v1189 = vld [vmem:[#allocation1 + $0x1b] sm:$0xff]
          %1194 = vmatpush.bf16.msra.mxu0 %v1159
          %1195 = vmatpush.bf16.msra.mxu0 %v1158
          %1196 = vmatpush.bf16.msra.mxu0 %v1157
          %1197 = vmatpush.bf16.msra.mxu0 %v1156
          %1198 = vmatpush.bf16.msra.mxu0 %v1155
          %1199 = vmatpush.bf16.msra.mxu0 %v1154
          %1200 = vmatpush.bf16.msra.mxu0 %v1153
          %1201 = vmatpush.bf16.msra.mxu0 %v1152
          %1202 = vmatmul.bf16.gmra.mxu0 %v1186
          %v1203 = vpop.f32.mrf.mxu0
          %v1204 = vadd.f32 0.0, %v1203
          %v1205 = vpop.f32.mrf.mxu0
          %1206 = vdwg.mxu0
          %1207 = vmatpush.bf16.msra.mxu0 %v1167
          %1208 = vmatpush.bf16.msra.mxu0 %v1166
          %1209 = vmatpush.bf16.msra.mxu0 %v1165
          %1210 = vmatpush.bf16.msra.mxu0 %v1164
          %1211 = vmatpush.bf16.msra.mxu0 %v1163
          %1212 = vmatpush.bf16.msra.mxu0 %v1162
          %1213 = vmatpush.bf16.msra.mxu0 %v1161
          %1214 = vmatpush.bf16.msra.mxu0 %v1160
          %1215 = vmatmul.bf16.gmra.mxu0 %v1187
          %v1216 = vpop.f32.mrf.mxu0
          %v1217 = vadd.f32 %v1204, %v1216
          %v1218 = vpop.f32.mrf.mxu0
          %1219 = vdwg.mxu0
          %1220 = vmatpush.bf16.msra.mxu0 %v1175
          %1221 = vmatpush.bf16.msra.mxu0 %v1174
          %1222 = vmatpush.bf16.msra.mxu0 %v1173
          %1223 = vmatpush.bf16.msra.mxu0 %v1172
          %1224 = vmatpush.bf16.msra.mxu0 %v1171
          %1225 = vmatpush.bf16.msra.mxu0 %v1170
          %1226 = vmatpush.bf16.msra.mxu0 %v1169
          %1227 = vmatpush.bf16.msra.mxu0 %v1168
          %1228 = vmatmul.bf16.gmra.mxu0 %v1188
          %v1229 = vpop.f32.mrf.mxu0
          %v1230 = vadd.f32 %v1217, %v1229
          %v1231 = vpop.f32.mrf.mxu0
          %1232 = vdwg.mxu0
          %1233 = vmatpush.bf16.msra.mxu0 %v1183
          %1234 = vmatpush.bf16.msra.mxu0 %v1182
          %1235 = vmatpush.bf16.msra.mxu0 %v1181
          %1236 = vmatpush.bf16.msra.mxu0 %v1180
          %1237 = vmatpush.bf16.msra.mxu0 %v1179
          %1238 = vmatpush.bf16.msra.mxu0 %v1178
          %1239 = vmatpush.bf16.msra.mxu0 %v1177
          %1240 = vmatpush.bf16.msra.mxu0 %v1176
          %1241 = vmatmul.bf16.gmra.mxu0 %v1189
          %v1242 = vpop.f32.mrf.mxu0
          %v1243 = vadd.f32 %v1230, %v1242
          %v1244 = vpop.f32.mrf.mxu0
          %1245 = vdwg.mxu0
          %v1246 = vadd.f32 %v1150, %v1243
          %1247 = vst [vmem:[#allocation3] sm:$0x3] %v1246
        $region64: #{tpu_custom_call.1} parent=47 // pred_fallthru
          _
        %p1248 = scmp.eq.s32.totalorder %s36, 1
        %p1249 = pnand %p587, %p1248
        %p1250 = pneg %p1249
        // Predicated region
        $region65: #{tpu_custom_call.1} parent=47 // pred_check
          _
        $region66: #{tpu_custom_call.1} parent=47 // pred_check_branch
          %1252 = sbr.rel (%p1249) target = $region68
        $region67: #{tpu_custom_call.1} parent=47 // pred_region
          %v1253 = vld [vmem:[#allocation2] sm:$0x3]
          %v1254 = vld [vmem:[%s3] sm:$0x1]
          %v1256 = vperm.slane %v1254, 0
          %v1258 = vadd.f32 %v1253, %v1256
          %v1259 = vld [vmem:[#allocation3] sm:$0x3]
          %v1260 = vld [vmem:[#allocation7] sm:$0x1]
          %v1261 = vmul.f32 %v1260, 0.2
          %v1262 = vmul.f32 %v1254, 0.8
          %v1263 = vadd.f32 %v1261, %v1262
          %v1265 = vperm.slane %v1263, 0
          %v1267 = vadd.f32 %v1259, %v1265
          %1268 = vst [vmem:[#allocation2] sm:$0x3] %v1258
          %1269 = vst [vmem:[#allocation3] sm:$0x3] %v1267
          %1270 = vst [vmem:[#allocation9] sm:$0x3] %v1258
          %1271 = vst [vmem:[#allocation10] sm:$0x3] %v1267
          %v1272 = vlaneseq
          %v1273 = vand.u32 %v1272, 127
          %vm1274 = vcmp.lt.s32.totalorder %v1273, 32
          %v1275 = vsel %vm1274, 1, 0
          %v1276 = vcvt.s32.f32 %v1275
          %v1277 = vmul.f32 %v1258, %v1267
          %v1278 = vmul.f32 %v1277, %v1276
          %vm1279 = vcmask 1041408
          %v1280 = vsel %vm1279, %v1278, 0.0
          %1281 = vadd.xlane.f32.xlu0 %v1280
          %v1282 = vpop.xlane.xlu0 %1281
          %v1283 = vmul.f32 %v1282, 14.285714
          %1284 = vst [vmem:[#allocation12] sm:$0x3] %v1283
        $region68: #{tpu_custom_call.1} parent=47 // pred_fallthru
          _
        // Predicated region
        $region69: #{tpu_custom_call.1} parent=47 // pred_check
          %p1285 = pneg %p1248
        $region70: #{tpu_custom_call.1} parent=47 // pred_check_branch
          %1287 = sbr.rel (%p1285) target = $region72
        $region71: #{tpu_custom_call.1} parent=47 // pred_region
          %v1288 = vld [vmem:[#allocation2] sm:$0x3]
          %v1289 = vpack.c.bf16 %v1288, %v1288
          %v1290 = vld [vmem:[%s583] sm:$0xf]
          %v1291 = vld [vmem:[%s583 + $0x4] sm:$0xf]
          %v1292 = vld [vmem:[%s583 + $0x8] sm:$0xf]
          %v1293 = vld [vmem:[%s583 + $0xc] sm:$0xf]
          %v1294 = vld [vmem:[%s583 + $0x10] sm:$0xf]
          %v1295 = vld [vmem:[%s583 + $0x14] sm:$0xf]
          %v1296 = vld [vmem:[%s583 + $0x18] sm:$0xf]
          %v1297 = vld [vmem:[%s583 + $0x1c] sm:$0xf]
          %v1298 = vld [vmem:[%s583 + $0x20] sm:$0xf]
          %v1299 = vld [vmem:[%s583 + $0x24] sm:$0xf]
          %v1300 = vld [vmem:[%s583 + $0x28] sm:$0xf]
          %v1301 = vld [vmem:[%s583 + $0x2c] sm:$0xf]
          %v1302 = vld [vmem:[%s583 + $0x30] sm:$0xf]
          %v1303 = vld [vmem:[%s583 + $0x34] sm:$0xf]
          %v1304 = vld [vmem:[%s583 + $0x38] sm:$0xf]
          %v1305 = vld [vmem:[%s583 + $0x3c] sm:$0xf]
          %v1322 = vunpack.c.l.b16 %v1290
          %v1323 = vunpack.c.l.b16 %v1291
          %v1324 = vunpack.c.l.b16 %v1292
          %v1325 = vunpack.c.l.b16 %v1293
          %v1326 = vunpack.c.l.b16 %v1294
          %v1327 = vunpack.c.l.b16 %v1295
          %v1328 = vunpack.c.l.b16 %v1296
          %v1329 = vunpack.c.l.b16 %v1297
          %v1330 = vunpack.c.l.b16 %v1298
          %v1331 = vunpack.c.l.b16 %v1299
          %v1332 = vunpack.c.l.b16 %v1300
          %v1333 = vunpack.c.l.b16 %v1301
          %v1334 = vunpack.c.l.b16 %v1302
          %v1335 = vunpack.c.l.b16 %v1303
          %v1336 = vunpack.c.l.b16 %v1304
          %v1337 = vunpack.c.l.b16 %v1305
          %v1338 = vpack.c.b16 %v1323, %v1322
          %v1339 = vpack.c.b16 %v1325, %v1324
          %v1340 = vpack.c.b16 %v1327, %v1326
          %v1341 = vpack.c.b16 %v1329, %v1328
          %v1342 = vpack.c.b16 %v1331, %v1330
          %v1343 = vpack.c.b16 %v1333, %v1332
          %v1344 = vpack.c.b16 %v1335, %v1334
          %v1345 = vpack.c.b16 %v1337, %v1336
          %1354 = vmatpush.bf16.msra.mxu0 %v1345
          %1355 = vmatpush.bf16.msra.mxu0 %v1344
          %1356 = vmatpush.bf16.msra.mxu0 %v1343
          %1357 = vmatpush.bf16.msra.mxu0 %v1342
          %1358 = vmatpush.bf16.msra.mxu0 %v1341
          %1359 = vmatpush.bf16.msra.mxu0 %v1340
          %1360 = vmatpush.bf16.msra.mxu0 %v1339
          %1361 = vmatpush.bf16.msra.mxu0 %v1338
          %1362 = vmatmul.bf16.gmra.mxu0 %v1289
          %v1363 = vpop.f32.mrf.mxu0
          %v1364 = vadd.f32 0.0, %v1363
          %v1365 = vpop.f32.mrf.mxu0
          %1366 = vdwg.mxu0
          %v1367 = vmul.f32 %v1364, 14.285714
          %1368 = vst [vmem:[#allocation13] sm:$0x3] %v1367
        $region72: #{tpu_custom_call.1} parent=47 // pred_fallthru
          _
        %s1369 = sand.u32 %s31, 1
        %s1370 = scalar_lea.sflag [#allocation6], %s1369
        %s1371 = sand.u32 %s332, 1
        %s1372 = smul.addr %s1371, 512
        %s1373 = scalar_lea.vmem [#allocation15], %s1372
        // Predicated region
        $region73: #{tpu_custom_call.1} parent=47 // pred_check
          %p1374 = pneg %p244
        $region74: #{tpu_custom_call.1} parent=47 // pred_check_branch
          %1376 = sbr.rel (%p1374) target = $region76
        $region75: #{tpu_custom_call.1} parent=47 // pred_region
          %1378 = vsyncadd [#allocation6], 0
          %s1380 = sshll.u32 [#allocation9], 4
          %s1381 = int_to_ptr.vmem [resolvable:$true] %s1380
          %s1382 = sshll.u32 %s7, 4
          %s1383 = int_to_ptr.hbm [resolvable:$true] %s1382
          %1385 = dma.vmem_to_hbm [thread:$0]  %s1381, 32, %s1383, [#allocation6]
        $region76: #{tpu_custom_call.1} parent=47 // pred_fallthru
          _
        // Predicated region
        $region77: #{tpu_custom_call.1} parent=47 // pred_check
          %p1386 = pneg %p265
        $region78: #{tpu_custom_call.1} parent=47 // pred_check_branch
          %1388 = sbr.rel (%p1386) target = $region80
        $region79: #{tpu_custom_call.1} parent=47 // pred_region
          %1390 = vsyncadd [#allocation11], 0
          %s1392 = sshll.u32 [#allocation10], 4
          %s1393 = int_to_ptr.vmem [resolvable:$true] %s1392
          %s1394 = sshll.u32 %s8, 4
          %s1395 = int_to_ptr.hbm [resolvable:$true] %s1394
          %1397 = dma.vmem_to_hbm [thread:$0]  %s1393, 32, %s1395, [#allocation11]
        $region80: #{tpu_custom_call.1} parent=47 // pred_fallthru
          _
        // Predicated region
        $region81: #{tpu_custom_call.1} parent=47 // pred_check
          %p1398 = pneg %p286
        $region82: #{tpu_custom_call.1} parent=47 // pred_check_branch
          %1400 = sbr.rel (%p1398) target = $region84
        $region83: #{tpu_custom_call.1} parent=47 // pred_region
          %1402 = vsyncadd [#allocation11], 0
          %s1404 = sshll.u32 [#allocation12], 4
          %s1405 = int_to_ptr.vmem [resolvable:$true] %s1404
          %s1406 = sshll.u32 %s9, 4
          %s1407 = int_to_ptr.hbm [resolvable:$true] %s1406
          %1409 = dma.vmem_to_hbm [thread:$0]  %s1405, 32, %s1407, [#allocation11]
        $region84: #{tpu_custom_call.1} parent=47 // pred_fallthru
          _
        // Predicated region
        $region85: #{tpu_custom_call.1} parent=47 // pred_check
          %p1410 = pneg %p312
        $region86: #{tpu_custom_call.1} parent=47 // pred_check_branch
          %1412 = sbr.rel (%p1410) target = $region88
        $region87: #{tpu_custom_call.1} parent=47 // pred_region
          %1414 = vsyncadd [#allocation14], 0
          %s1415 = smul.addr %s35, 2
          %s1416 = scalar_lea.hbm %s10, %s1415
          %s1418 = sshll.u32 [#allocation13], 4
          %s1419 = int_to_ptr.vmem [resolvable:$true] %s1418
          %s1420 = sshll.u32 %s1416, 4
          %s1421 = int_to_ptr.hbm [resolvable:$true] %s1420
          %1423 = dma.vmem_to_hbm [thread:$0]  %s1419, 32, %s1421, [#allocation14]
        $region88: #{tpu_custom_call.1} parent=47 // pred_fallthru
          _
        // Predicated region
        $region89: #{tpu_custom_call.1} parent=47 // pred_check
          %p1424 = pneg %p342
        $region90: #{tpu_custom_call.1} parent=47 // pred_check_branch
          %1426 = sbr.rel (%p1424) target = $region92
        $region91: #{tpu_custom_call.1} parent=47 // pred_region
          %p1427 = scmp.eq.s32.totalorder %s35, 0
          %s1428 = scalar_select %p1427, %s36, 1
          %s1429 = smul.u32 64, %s1428
          %1431 = vsyncadd %s1370, 0
          %s1432 = smul.addr %s1429, 8
          %s1433 = scalar_lea.hbm %s11, %s1432
          %s1434 = sshll.u32 %s1373, 4
          %s1435 = int_to_ptr.vmem [resolvable:$true] %s1434
          %s1436 = sshll.u32 %s1433, 4
          %s1437 = int_to_ptr.hbm [resolvable:$true] %s1436
          %1442 = dma.vmem_to_hbm [thread:$0]  %s1435, 8192, %s1437, %s1370, 128, 128, 8
        $region92: #{tpu_custom_call.1} parent=47 // pred_fallthru
          _
        // Predicated region
        $region93: #{tpu_custom_call.1} parent=47 // pred_check
          %p1443 = pneg %p363
        $region94: #{tpu_custom_call.1} parent=47 // pred_check_branch
          %1445 = sbr.rel (%p1443) target = $region96
        $region95: #{tpu_custom_call.1} parent=47 // pred_region
          %1447 = vsyncadd [#allocation11], 0
          %s1449 = sshll.u32 [#allocation16], 4
          %s1450 = int_to_ptr.vmem [resolvable:$true] %s1449
          %s1451 = sshll.u32 %s12, 4
          %s1452 = int_to_ptr.hbm [resolvable:$true] %s1451
          %1454 = dma.vmem_to_hbm [thread:$0]  %s1450, 16, %s1452, [#allocation11]
        $region96: #{tpu_custom_call.1} parent=47 // pred_fallthru
          _
        // Predicated region
        $region97: #{tpu_custom_call.1} parent=47 // pred_check
          %p1455 = pneg %p244
        $region98: #{tpu_custom_call.1} parent=47 // pred_check_branch
          %1457 = sbr.rel (%p1455) target = $region100
        $region99: #{tpu_custom_call.1} parent=47 // pred_region
          %1459 = dma.done [#allocation6], 32
        $region100: #{tpu_custom_call.1} parent=47 // pred_fallthru
          _
        // Predicated region
        $region101: #{tpu_custom_call.1} parent=47 // pred_check
          %p1460 = pneg %p265
        $region102: #{tpu_custom_call.1} parent=47 // pred_check_branch
          %1462 = sbr.rel (%p1460) target = $region104
        $region103: #{tpu_custom_call.1} parent=47 // pred_region
          %1464 = dma.done [#allocation11], 32
        $region104: #{tpu_custom_call.1} parent=47 // pred_fallthru
          _
        // Predicated region
        $region105: #{tpu_custom_call.1} parent=47 // pred_check
          %p1465 = pneg %p286
        $region106: #{tpu_custom_call.1} parent=47 // pred_check_branch
          %1467 = sbr.rel (%p1465) target = $region108
        $region107: #{tpu_custom_call.1} parent=47 // pred_region
          %1469 = dma.done [#allocation11], 32
        $region108: #{tpu_custom_call.1} parent=47 // pred_fallthru
          _
        // Predicated region
        $region109: #{tpu_custom_call.1} parent=47 // pred_check
          %p1470 = pneg %p312
        $region110: #{tpu_custom_call.1} parent=47 // pred_check_branch
          %1472 = sbr.rel (%p1470) target = $region112
        $region111: #{tpu_custom_call.1} parent=47 // pred_region
          %1474 = dma.done [#allocation14], 32
        $region112: #{tpu_custom_call.1} parent=47 // pred_fallthru
          _
        // Predicated region
        $region113: #{tpu_custom_call.1} parent=47 // pred_check
          %p1475 = pneg %p363
        $region114: #{tpu_custom_call.1} parent=47 // pred_check_branch
          %1477 = sbr.rel (%p1475) target = $region116
        $region115: #{tpu_custom_call.1} parent=47 // pred_region
          %1479 = dma.done [#allocation11], 16
        $region116: #{tpu_custom_call.1} parent=47 // pred_fallthru
          _
      $region48: #{tpu_custom_call.1} parent=5 // pred_fallthru
        _
      %p1480 = scmp.le.s32.totalorder 2, %s26
      // Predicated region
      $region117: #{tpu_custom_call.1} parent=5 // pred_check
        %p1481 = pneg %p1480
      $region118: #{tpu_custom_call.1} parent=5 // pred_check_branch
        %1483 = sbr.rel (%p1481) target = $region120
      $region119: #{tpu_custom_call.1} parent=5 // pred_region
        %s1484 = ssub.s32 %s26, 2
        // Predicated region
        $region121: #{tpu_custom_call.1} parent=119 // pred_check
          %p1485 = pneg %p348
        $region122: #{tpu_custom_call.1} parent=119 // pred_check_branch
          %1487 = sbr.rel (%p1485) target = $region124
        $region123: #{tpu_custom_call.1} parent=119 // pred_region
          %s1488 = sand.u32 %s32, 1
          %s1489 = scalar_lea.sflag [#allocation6], %s1488
          %s1490 = sand.u32 %s333, 1
          %s1491 = smul.addr %s1490, 512
          %s1492 = scalar_lea.vmem [#allocation15], %s1491
          %1494 = dma.done %s1489, 8192
        $region124: #{tpu_custom_call.1} parent=119 // pred_fallthru
          _
      $region120: #{tpu_custom_call.1} parent=5 // pred_fallthru
        _
    $region6: #{tpu_custom_call.1} parent=1 // loop_footer
      %s30 = sadd.s32 1, %s26
    $region7: #{tpu_custom_call.1} parent=1 // loop_footer_branch
      %25 = sbr.rel target = $region3
    $region8: #{tpu_custom_call.1} parent=1 // loop_exit
      _
    %1495 = vsyncpa [#allocation5], 1
    %s1496 = scalar_lea.sflag [#allocation5], 1
    %1497 = vsyncpa %s1496, 1
    %1498 = vsyncpa [#allocation8], 1
    %1499 = vsyncpa [#allocation6], 1
    %s1500 = scalar_lea.sflag [#allocation6], 1
    %1501 = vsyncpa %s1500, 1
    %1502 = vsyncpa [#allocation11], 1
    %1503 = vsyncpa [#allocation14], 1

</llo_original>
